<compile_context>
chip_gen: v7x
topology: tpu7x:2x2x1
jax: 0.10.0
libtpu: 0.0.40
codegen_flags: <defaults>
</compile_context>

<pallas_src>
import functools

import jax
import jax.numpy as jnp
from jax.experimental import pallas as pl
from jax.experimental.pallas import tpu as pltpu


def _spatial_attention_kernel(x_ref, w_ref, o_ref, pad_ref, *, K, H, W, Bn, C):
    # x_ref:   (Bn, C, HW)             input tile (VMEM), lane-dense
    # w_ref:   (2*K*K,) f32            conv weights as SMEM scalars
    # o_ref:   (Bn, C, HW)             output tile (VMEM)
    # pad_ref: (2*Bn, HW + 2*M) f32    zero-padded stacked avg/max maps (VMEM)
    P = (K - 1) // 2
    HW = H * W
    M = P * W + P                      # flat zero padding on each side
    LV = HW + 2 * P * W                # working length of column-shifted maps
    S = 2 * Bn                         # sublane-stacked avg|max rows

    x = x_ref[...]                                       # (Bn, C, HW)

    # Channel-wise mean / max maps. Mean accumulates in f32 (bf16-safe).
    inv_c = jnp.float32(1.0 / C)
    avg = jnp.sum(x, axis=1, dtype=jnp.float32) * inv_c  # (Bn, HW) f32
    mx = jnp.max(x, axis=1).astype(jnp.float32)          # (Bn, HW) f32

    # Zero-padded, sublane-stacked flat maps in VMEM scratch. Any conv tap
    # that walks off the top/bottom of the image lands in the zero padding.
    # (Zeroed every step: with a "parallel" grid axis each core may start at a
    #  non-zero program_id, so a first-step-only init would be unsafe.)
    pad_ref[...] = jnp.zeros((S, HW + 2 * M), jnp.float32)
    pad_ref[0:Bn, M:M + HW] = avg                         # avg rows: 0..Bn-1
    pad_ref[Bn:S, M:M + HW] = mx                          # max rows: Bn..2Bn-1

    # Hoisted SMEM weight scalars: w[ch=0] -> avg channel, w[ch=1] -> max.
    wa = [[w_ref[ki * K + kj] for kj in range(K)] for ki in range(K)]
    wm = [[w_ref[K * K + ki * K + kj] for kj in range(K)] for ki in range(K)]

    # In-kernel column index (lane % W) and avg/max sublane selectors.
    lane = jax.lax.broadcasted_iota(jnp.int32, (S, LV), 1).astype(jnp.float32)
    col = lane - jnp.float32(W) * jnp.floor(lane / jnp.float32(W))  # exact
    row_id = jax.lax.broadcasted_iota(jnp.int32, (S, 1), 0)
    sel_avg = (row_id < Bn).astype(jnp.float32)           # (S, 1)
    sel_max = jnp.float32(1.0) - sel_avg

    # dj-outer / ki-inner accumulation: K persistent accumulators (one per
    # row offset), each column-shifted slice consumed immediately.
    acc = [None] * K
    for t in range(K):                                    # dj = t - P
        lo = jnp.float32(P - t)
        hi = jnp.float32(W - 1 - (t - P))
        cmask = ((col >= lo) & (col <= hi)).astype(jnp.float32)
        s_t = pad_ref[:, t:t + LV] * cmask                # (S, LV) f32
        for ki in range(K):                               # di = ki - P
            wcol = wa[ki][t] * sel_avg + wm[ki][t] * sel_max   # (S, 1)
            contrib = s_t * wcol
            acc[ki] = contrib if t == 0 else acc[ki] + contrib

    # Row-shift stage: one lane-slice of length HW per row offset, tree add.
    rows = [acc[ki][:, ki * W:ki * W + HW] for ki in range(K)]   # (S, HW)
    while len(rows) > 1:
        nxt = [rows[i] + rows[i + 1] for i in range(0, len(rows) - 1, 2)]
        if len(rows) % 2:
            nxt.append(rows[-1])
        rows = nxt
    total = rows[0]                                       # (S, HW) f32

    # Combine the avg and max halves of the sublane stack -> conv output.
    conv = total[0:Bn, :] + total[Bn:S, :]                # (Bn, HW) f32

    # Sigmoid (EUP), dtype-native scaling, lane-dense full-width store.
    att = jax.nn.sigmoid(conv).astype(o_ref.dtype)        # (Bn, HW)
    o_ref[...] = x_ref[...] * att[:, None, :]


def spatial_attention(x, conv_w):
    """x: (N, C, H, W); conv_w: (1, 2, K, K) — matches nn.Conv2d(2, 1, K, bias=False)."""
    N, C, H, W = x.shape
    K = conv_w.shape[-1]
    assert conv_w.shape == (1, 2, K, K) and K in (3, 7)
    P = (K - 1) // 2
    HW = H * W
    M = P * W + P

    # Batch block: largest divisor of N <= 4 so the stacked avg/max working
    # set uses up to 8 sublanes (full vregs) in the conv math.
    Bn = 1
    for cand in (4, 2):
        if N % cand == 0:
            Bn = cand
            break
    grid_n = N // Bn
    S = 2 * Bn

    x_flat = x.reshape(N, C, HW)                          # lane-dense view (free)
    w_flat = conv_w.reshape(-1).astype(jnp.float32)       # (2*K*K,) SMEM scalars

    # VMEM budget: in/out blocks double-buffered + padded-map scratch + small
    # f32 intermediates; capped at 48 MiB so it fits v7x's 64 MiB VMEM while
    # still comfortably above need on v5e/v6e (128 MiB).
    block_bytes = Bn * C * HW * x.dtype.itemsize
    scratch_bytes = S * (HW + 2 * M) * 4
    vmem_limit = int(min(max(4 * block_bytes + scratch_bytes + (4 << 20),
                             32 << 20), 48 << 20))

    kernel = functools.partial(_spatial_attention_kernel,
                               K=K, H=H, W=W, Bn=Bn, C=C)
    out_flat = pl.pallas_call(
        kernel,
        out_shape=jax.ShapeDtypeStruct((N, C, HW), x.dtype),
        grid_spec=pltpu.PrefetchScalarGridSpec(
            num_scalar_prefetch=0,
            grid=(grid_n,),
            in_specs=[
                pl.BlockSpec((Bn, C, HW), lambda n: (n, 0, 0)),
                pl.BlockSpec(memory_space=pltpu.MemorySpace.SMEM),
            ],
            out_specs=pl.BlockSpec((Bn, C, HW), lambda n: (n, 0, 0)),
            scratch_shapes=[pltpu.VMEM((S, HW + 2 * M), jnp.float32)],
        ),
        compiler_params=pltpu.CompilerParams(
            dimension_semantics=("parallel",),
            vmem_limit_bytes=vmem_limit,
        ),
    )(x_flat, w_flat)
    return out_flat.reshape(N, C, H, W)


def _reference(x, conv_w):
    """Pure-JAX reference of the PyTorch forward pass (NCHW)."""
    avg = jnp.mean(x, axis=1, keepdims=True)
    mx = jnp.max(x, axis=1, keepdims=True)
    cat = jnp.concatenate([avg, mx], axis=1)
    K = conv_w.shape[-1]
    P = (K - 1) // 2
    out = jax.lax.conv_general_dilated(
        cat, conv_w, window_strides=(1, 1), padding=[(P, P), (P, P)],
        dimension_numbers=("NCHW", "OIHW", "NCHW"),
        precision=jax.lax.Precision.HIGHEST)
    return x * jax.nn.sigmoid(out)


if __name__ == "__main__":
    key = jax.random.PRNGKey(0)
    kx, kw, kx2, kw2 = jax.random.split(key, 4)

    # Main shape: SpatialAttention(kernel_size=7) on a (2, 4, 16, 16) input.
    N, C, H, W = 2, 4, 16, 16
    kernel_size = 7
    x = jax.random.normal(kx, (N, C, H, W), dtype=jnp.float32)
    fan_in = 2 * kernel_size * kernel_size
    bound = 1.0 / (fan_in ** 0.5)
    conv_w = jax.random.uniform(
        kw, (1, 2, kernel_size, kernel_size), dtype=jnp.float32,
        minval=-bound, maxval=bound)

    out = jax.block_until_ready(spatial_attention(x, conv_w))
    ref = _reference(x, conv_w)
    assert out.shape == (N, C, H, W)
    assert jnp.allclose(out, ref, atol=2e-5, rtol=2e-5), "mismatch vs reference (K=7)"

    # Extra validation requested by the review: kernel_size=3 with non-square H != W.
    x2 = jax.random.normal(kx2, (2, 3, 8, 16), dtype=jnp.float32)
    bound2 = 1.0 / ((2 * 3 * 3) ** 0.5)
    conv_w2 = jax.random.uniform(
        kw2, (1, 2, 3, 3), dtype=jnp.float32, minval=-bound2, maxval=bound2)
    out2 = jax.block_until_ready(spatial_attention(x2, conv_w2))
    ref2 = _reference(x2, conv_w2)
    assert jnp.allclose(out2, ref2, atol=2e-5, rtol=2e-5), "mismatch vs reference (K=3)"

    print("KERNEL_OK")
</pallas_src>

<mosaic_0001>
module attributes {stable_mosaic.version = 11 : i64} {
  func.func @_spatial_attention_kernel(%arg0: i32, %arg1: memref<2x4x256xf32, #tpu.memory_space<vmem>>, %arg2: memref<98xf32, #tpu.memory_space<smem>>, %arg3: memref<2x4x256xf32, #tpu.memory_space<vmem>>, %arg4: memref<4x358xf32, #tpu.memory_space<vmem>>) attributes {dimension_semantics = [#tpu.dimension_semantics<parallel>], iteration_bounds = array<i64: 1>, scalar_prefetch = 0 : i64, scratch_operands = 1 : i64, tpu.core_type = #tpu.core_type<tc>, window_params = [{transform_indices = @transform_0, window_bounds = array<i64: 2, 4, 256>}, {transform_indices = @transform_1, window_bounds = array<i64: 98>}, {transform_indices = @transform_2, window_bounds = array<i64: 2, 4, 256>}]} {
    %c0 = arith.constant 0 : index
    %c0_0 = arith.constant 0 : index
    %c0_1 = arith.constant 0 : index
    %0 = vector.load %arg1[%c0, %c0_0, %c0_1] : memref<2x4x256xf32, #tpu.memory_space<vmem>>, vector<2x4x256xf32>
    %cst = arith.constant dense<0.000000e+00> : vector<2x256xf32>
    %1 = vector.multi_reduction <add>, %0, %cst [1] : vector<2x4x256xf32> to vector<2x256xf32>
    %cst_2 = arith.constant 2.500000e-01 : f32
    %2 = vector.broadcast %cst_2 : f32 to vector<2x256xf32>
    %3 = arith.mulf %1, %2 : vector<2x256xf32>
    %cst_3 = arith.constant dense<0xFF800000> : vector<2x256xf32>
    %4 = vector.multi_reduction <maximumf>, %0, %cst_3 [1] : vector<2x4x256xf32> to vector<2x256xf32>
    %cst_4 = arith.constant 0.000000e+00 : f32
    %5 = vector.broadcast %cst_4 : f32 to vector<4x358xf32>
    %c0_5 = arith.constant 0 : index
    %c0_6 = arith.constant 0 : index
    %6 = vector.load %arg4[%c0_5, %c0_6] : memref<4x358xf32, #tpu.memory_space<vmem>>, vector<4x358xf32>
    tpu.vector_store %arg4[%c0_5, %c0_6], %5 {strides = array<i32>} : memref<4x358xf32, #tpu.memory_space<vmem>>, vector<4x358xf32>,
    %c0_7 = arith.constant 0 : index
    %c51 = arith.constant 51 : index
    %7 = vector.load %arg4[%c0_7, %c51] : memref<4x358xf32, #tpu.memory_space<vmem>>, vector<2x256xf32>
    tpu.vector_store %arg4[%c0_7, %c51], %3 {strides = array<i32>} : memref<4x358xf32, #tpu.memory_space<vmem>>, vector<2x256xf32>,
    %c2 = arith.constant 2 : index
    %c51_8 = arith.constant 51 : index
    %8 = vector.load %arg4[%c2, %c51_8] : memref<4x358xf32, #tpu.memory_space<vmem>>, vector<2x256xf32>
    tpu.vector_store %arg4[%c2, %c51_8], %4 {strides = array<i32>} : memref<4x358xf32, #tpu.memory_space<vmem>>, vector<2x256xf32>,
    %c0_9 = arith.constant 0 : index
    %9 = memref.load %arg2[%c0_9] : memref<98xf32, #tpu.memory_space<smem>>
    %c1 = arith.constant 1 : index
    %10 = memref.load %arg2[%c1] : memref<98xf32, #tpu.memory_space<smem>>
    %c2_10 = arith.constant 2 : index
    %11 = memref.load %arg2[%c2_10] : memref<98xf32, #tpu.memory_space<smem>>
    %c3 = arith.constant 3 : index
    %12 = memref.load %arg2[%c3] : memref<98xf32, #tpu.memory_space<smem>>
    %c4 = arith.constant 4 : index
    %13 = memref.load %arg2[%c4] : memref<98xf32, #tpu.memory_space<smem>>
    %c5 = arith.constant 5 : index
    %14 = memref.load %arg2[%c5] : memref<98xf32, #tpu.memory_space<smem>>
    %c6 = arith.constant 6 : index
    %15 = memref.load %arg2[%c6] : memref<98xf32, #tpu.memory_space<smem>>
    %c7 = arith.constant 7 : index
    %16 = memref.load %arg2[%c7] : memref<98xf32, #tpu.memory_space<smem>>
    %c8 = arith.constant 8 : index
    %17 = memref.load %arg2[%c8] : memref<98xf32, #tpu.memory_space<smem>>
    %c9 = arith.constant 9 : index
    %18 = memref.load %arg2[%c9] : memref<98xf32, #tpu.memory_space<smem>>
    %c10 = arith.constant 10 : index
    %19 = memref.load %arg2[%c10] : memref<98xf32, #tpu.memory_space<smem>>
    %c11 = arith.constant 11 : index
    %20 = memref.load %arg2[%c11] : memref<98xf32, #tpu.memory_space<smem>>
    %c12 = arith.constant 12 : index
    %21 = memref.load %arg2[%c12] : memref<98xf32, #tpu.memory_space<smem>>
    %c13 = arith.constant 13 : index
    %22 = memref.load %arg2[%c13] : memref<98xf32, #tpu.memory_space<smem>>
    %c14 = arith.constant 14 : index
    %23 = memref.load %arg2[%c14] : memref<98xf32, #tpu.memory_space<smem>>
    %c15 = arith.constant 15 : index
    %24 = memref.load %arg2[%c15] : memref<98xf32, #tpu.memory_space<smem>>
    %c16 = arith.constant 16 : index
    %25 = memref.load %arg2[%c16] : memref<98xf32, #tpu.memory_space<smem>>
    %c17 = arith.constant 17 : index
    %26 = memref.load %arg2[%c17] : memref<98xf32, #tpu.memory_space<smem>>
    %c18 = arith.constant 18 : index
    %27 = memref.load %arg2[%c18] : memref<98xf32, #tpu.memory_space<smem>>
    %c19 = arith.constant 19 : index
    %28 = memref.load %arg2[%c19] : memref<98xf32, #tpu.memory_space<smem>>
    %c20 = arith.constant 20 : index
    %29 = memref.load %arg2[%c20] : memref<98xf32, #tpu.memory_space<smem>>
    %c21 = arith.constant 21 : index
    %30 = memref.load %arg2[%c21] : memref<98xf32, #tpu.memory_space<smem>>
    %c22 = arith.constant 22 : index
    %31 = memref.load %arg2[%c22] : memref<98xf32, #tpu.memory_space<smem>>
    %c23 = arith.constant 23 : index
    %32 = memref.load %arg2[%c23] : memref<98xf32, #tpu.memory_space<smem>>
    %c24 = arith.constant 24 : index
    %33 = memref.load %arg2[%c24] : memref<98xf32, #tpu.memory_space<smem>>
    %c25 = arith.constant 25 : index
    %34 = memref.load %arg2[%c25] : memref<98xf32, #tpu.memory_space<smem>>
    %c26 = arith.constant 26 : index
    %35 = memref.load %arg2[%c26] : memref<98xf32, #tpu.memory_space<smem>>
    %c27 = arith.constant 27 : index
    %36 = memref.load %arg2[%c27] : memref<98xf32, #tpu.memory_space<smem>>
    %c28 = arith.constant 28 : index
    %37 = memref.load %arg2[%c28] : memref<98xf32, #tpu.memory_space<smem>>
    %c29 = arith.constant 29 : index
    %38 = memref.load %arg2[%c29] : memref<98xf32, #tpu.memory_space<smem>>
    %c30 = arith.constant 30 : index
    %39 = memref.load %arg2[%c30] : memref<98xf32, #tpu.memory_space<smem>>
    %c31 = arith.constant 31 : index
    %40 = memref.load %arg2[%c31] : memref<98xf32, #tpu.memory_space<smem>>
    %c32 = arith.constant 32 : index
    %41 = memref.load %arg2[%c32] : memref<98xf32, #tpu.memory_space<smem>>
    %c33 = arith.constant 33 : index
    %42 = memref.load %arg2[%c33] : memref<98xf32, #tpu.memory_space<smem>>
    %c34 = arith.constant 34 : index
    %43 = memref.load %arg2[%c34] : memref<98xf32, #tpu.memory_space<smem>>
    %c35 = arith.constant 35 : index
    %44 = memref.load %arg2[%c35] : memref<98xf32, #tpu.memory_space<smem>>
    %c36 = arith.constant 36 : index
    %45 = memref.load %arg2[%c36] : memref<98xf32, #tpu.memory_space<smem>>
    %c37 = arith.constant 37 : index
    %46 = memref.load %arg2[%c37] : memref<98xf32, #tpu.memory_space<smem>>
    %c38 = arith.constant 38 : index
    %47 = memref.load %arg2[%c38] : memref<98xf32, #tpu.memory_space<smem>>
    %c39 = arith.constant 39 : index
    %48 = memref.load %arg2[%c39] : memref<98xf32, #tpu.memory_space<smem>>
    %c40 = arith.constant 40 : index
    %49 = memref.load %arg2[%c40] : memref<98xf32, #tpu.memory_space<smem>>
    %c41 = arith.constant 41 : index
    %50 = memref.load %arg2[%c41] : memref<98xf32, #tpu.memory_space<smem>>
    %c42 = arith.constant 42 : index
    %51 = memref.load %arg2[%c42] : memref<98xf32, #tpu.memory_space<smem>>
    %c43 = arith.constant 43 : index
    %52 = memref.load %arg2[%c43] : memref<98xf32, #tpu.memory_space<smem>>
    %c44 = arith.constant 44 : index
    %53 = memref.load %arg2[%c44] : memref<98xf32, #tpu.memory_space<smem>>
    %c45 = arith.constant 45 : index
    %54 = memref.load %arg2[%c45] : memref<98xf32, #tpu.memory_space<smem>>
    %c46 = arith.constant 46 : index
    %55 = memref.load %arg2[%c46] : memref<98xf32, #tpu.memory_space<smem>>
    %c47 = arith.constant 47 : index
    %56 = memref.load %arg2[%c47] : memref<98xf32, #tpu.memory_space<smem>>
    %c48 = arith.constant 48 : index
    %57 = memref.load %arg2[%c48] : memref<98xf32, #tpu.memory_space<smem>>
    %c49 = arith.constant 49 : index
    %58 = memref.load %arg2[%c49] : memref<98xf32, #tpu.memory_space<smem>>
    %c50 = arith.constant 50 : index
    %59 = memref.load %arg2[%c50] : memref<98xf32, #tpu.memory_space<smem>>
    %c51_11 = arith.constant 51 : index
    %60 = memref.load %arg2[%c51_11] : memref<98xf32, #tpu.memory_space<smem>>
    %c52 = arith.constant 52 : index
    %61 = memref.load %arg2[%c52] : memref<98xf32, #tpu.memory_space<smem>>
    %c53 = arith.constant 53 : index
    %62 = memref.load %arg2[%c53] : memref<98xf32, #tpu.memory_space<smem>>
    %c54 = arith.constant 54 : index
    %63 = memref.load %arg2[%c54] : memref<98xf32, #tpu.memory_space<smem>>
    %c55 = arith.constant 55 : index
    %64 = memref.load %arg2[%c55] : memref<98xf32, #tpu.memory_space<smem>>
    %c56 = arith.constant 56 : index
    %65 = memref.load %arg2[%c56] : memref<98xf32, #tpu.memory_space<smem>>
    %c57 = arith.constant 57 : index
    %66 = memref.load %arg2[%c57] : memref<98xf32, #tpu.memory_space<smem>>
    %c58 = arith.constant 58 : index
    %67 = memref.load %arg2[%c58] : memref<98xf32, #tpu.memory_space<smem>>
    %c59 = arith.constant 59 : index
    %68 = memref.load %arg2[%c59] : memref<98xf32, #tpu.memory_space<smem>>
    %c60 = arith.constant 60 : index
    %69 = memref.load %arg2[%c60] : memref<98xf32, #tpu.memory_space<smem>>
    %c61 = arith.constant 61 : index
    %70 = memref.load %arg2[%c61] : memref<98xf32, #tpu.memory_space<smem>>
    %c62 = arith.constant 62 : index
    %71 = memref.load %arg2[%c62] : memref<98xf32, #tpu.memory_space<smem>>
    %c63 = arith.constant 63 : index
    %72 = memref.load %arg2[%c63] : memref<98xf32, #tpu.memory_space<smem>>
    %c64 = arith.constant 64 : index
    %73 = memref.load %arg2[%c64] : memref<98xf32, #tpu.memory_space<smem>>
    %c65 = arith.constant 65 : index
    %74 = memref.load %arg2[%c65] : memref<98xf32, #tpu.memory_space<smem>>
    %c66 = arith.constant 66 : index
    %75 = memref.load %arg2[%c66] : memref<98xf32, #tpu.memory_space<smem>>
    %c67 = arith.constant 67 : index
    %76 = memref.load %arg2[%c67] : memref<98xf32, #tpu.memory_space<smem>>
    %c68 = arith.constant 68 : index
    %77 = memref.load %arg2[%c68] : memref<98xf32, #tpu.memory_space<smem>>
    %c69 = arith.constant 69 : index
    %78 = memref.load %arg2[%c69] : memref<98xf32, #tpu.memory_space<smem>>
    %c70 = arith.constant 70 : index
    %79 = memref.load %arg2[%c70] : memref<98xf32, #tpu.memory_space<smem>>
    %c71 = arith.constant 71 : index
    %80 = memref.load %arg2[%c71] : memref<98xf32, #tpu.memory_space<smem>>
    %c72 = arith.constant 72 : index
    %81 = memref.load %arg2[%c72] : memref<98xf32, #tpu.memory_space<smem>>
    %c73 = arith.constant 73 : index
    %82 = memref.load %arg2[%c73] : memref<98xf32, #tpu.memory_space<smem>>
    %c74 = arith.constant 74 : index
    %83 = memref.load %arg2[%c74] : memref<98xf32, #tpu.memory_space<smem>>
    %c75 = arith.constant 75 : index
    %84 = memref.load %arg2[%c75] : memref<98xf32, #tpu.memory_space<smem>>
    %c76 = arith.constant 76 : index
    %85 = memref.load %arg2[%c76] : memref<98xf32, #tpu.memory_space<smem>>
    %c77 = arith.constant 77 : index
    %86 = memref.load %arg2[%c77] : memref<98xf32, #tpu.memory_space<smem>>
    %c78 = arith.constant 78 : index
    %87 = memref.load %arg2[%c78] : memref<98xf32, #tpu.memory_space<smem>>
    %c79 = arith.constant 79 : index
    %88 = memref.load %arg2[%c79] : memref<98xf32, #tpu.memory_space<smem>>
    %c80 = arith.constant 80 : index
    %89 = memref.load %arg2[%c80] : memref<98xf32, #tpu.memory_space<smem>>
    %c81 = arith.constant 81 : index
    %90 = memref.load %arg2[%c81] : memref<98xf32, #tpu.memory_space<smem>>
    %c82 = arith.constant 82 : index
    %91 = memref.load %arg2[%c82] : memref<98xf32, #tpu.memory_space<smem>>
    %c83 = arith.constant 83 : index
    %92 = memref.load %arg2[%c83] : memref<98xf32, #tpu.memory_space<smem>>
    %c84 = arith.constant 84 : index
    %93 = memref.load %arg2[%c84] : memref<98xf32, #tpu.memory_space<smem>>
    %c85 = arith.constant 85 : index
    %94 = memref.load %arg2[%c85] : memref<98xf32, #tpu.memory_space<smem>>
    %c86 = arith.constant 86 : index
    %95 = memref.load %arg2[%c86] : memref<98xf32, #tpu.memory_space<smem>>
    %c87 = arith.constant 87 : index
    %96 = memref.load %arg2[%c87] : memref<98xf32, #tpu.memory_space<smem>>
    %c88 = arith.constant 88 : index
    %97 = memref.load %arg2[%c88] : memref<98xf32, #tpu.memory_space<smem>>
    %c89 = arith.constant 89 : index
    %98 = memref.load %arg2[%c89] : memref<98xf32, #tpu.memory_space<smem>>
    %c90 = arith.constant 90 : index
    %99 = memref.load %arg2[%c90] : memref<98xf32, #tpu.memory_space<smem>>
    %c91 = arith.constant 91 : index
    %100 = memref.load %arg2[%c91] : memref<98xf32, #tpu.memory_space<smem>>
    %c92 = arith.constant 92 : index
    %101 = memref.load %arg2[%c92] : memref<98xf32, #tpu.memory_space<smem>>
    %c93 = arith.constant 93 : index
    %102 = memref.load %arg2[%c93] : memref<98xf32, #tpu.memory_space<smem>>
    %c94 = arith.constant 94 : index
    %103 = memref.load %arg2[%c94] : memref<98xf32, #tpu.memory_space<smem>>
    %c95 = arith.constant 95 : index
    %104 = memref.load %arg2[%c95] : memref<98xf32, #tpu.memory_space<smem>>
    %c96 = arith.constant 96 : index
    %105 = memref.load %arg2[%c96] : memref<98xf32, #tpu.memory_space<smem>>
    %c97 = arith.constant 97 : index
    %106 = memref.load %arg2[%c97] : memref<98xf32, #tpu.memory_space<smem>>
    %107 = tpu.iota {dimensions = array<i32: 1>} : vector<4x352xi32>
    %108 = arith.sitofp %107 : vector<4x352xi32> to vector<4x352xf32>
    %cst_12 = arith.constant 1.600000e+01 : f32
    %109 = vector.broadcast %cst_12 : f32 to vector<4x352xf32>
    %110 = arith.divf %108, %109 : vector<4x352xf32>
    %111 = math.floor %110 : vector<4x352xf32>
    %cst_13 = arith.constant 1.600000e+01 : f32
    %112 = vector.broadcast %cst_13 : f32 to vector<4x352xf32>
    %113 = arith.mulf %112, %111 : vector<4x352xf32>
    %114 = arith.subf %108, %113 : vector<4x352xf32>
    %115 = tpu.iota {dimensions = array<i32: 0>} : vector<4x1xi32>
    %c2_i32 = arith.constant 2 : i32
    %116 = vector.broadcast %c2_i32 : i32 to vector<4x1xi32>
    %117 = arith.cmpi slt, %115, %116 : vector<4x1xi32>
    %118 = arith.extui %117 : vector<4x1xi1> to vector<4x1xi32>
    %119 = arith.sitofp %118 : vector<4x1xi32> to vector<4x1xf32>
    %cst_14 = arith.constant 1.000000e+00 : f32
    %120 = vector.broadcast %cst_14 : f32 to vector<4x1xf32>
    %121 = arith.subf %120, %119 : vector<4x1xf32>
    %cst_15 = arith.constant 3.000000e+00 : f32
    %122 = vector.broadcast %cst_15 : f32 to vector<4x352xf32>
    %123 = arith.cmpf oge, %114, %122 : vector<4x352xf32>
    %cst_16 = arith.constant 1.800000e+01 : f32
    %124 = vector.broadcast %cst_16 : f32 to vector<4x352xf32>
    %125 = arith.cmpf ole, %114, %124 : vector<4x352xf32>
    %126 = arith.andi %123, %125 : vector<4x352xi1>
    %127 = arith.extui %126 : vector<4x352xi1> to vector<4x352xi32>
    %128 = arith.sitofp %127 : vector<4x352xi32> to vector<4x352xf32>
    %c0_17 = arith.constant 0 : index
    %c0_18 = arith.constant 0 : index
    %129 = vector.load %arg4[%c0_17, %c0_18] : memref<4x358xf32, #tpu.memory_space<vmem>>, vector<4x352xf32>
    %130 = arith.mulf %129, %128 : vector<4x352xf32>
    %131 = vector.broadcast %9 : f32 to vector<4x1xf32>
    %132 = arith.mulf %131, %119 : vector<4x1xf32>
    %133 = vector.broadcast %58 : f32 to vector<4x1xf32>
    %134 = arith.mulf %133, %121 : vector<4x1xf32>
    %135 = arith.addf %132, %134 : vector<4x1xf32>
    %136 = vector.broadcast %135 : vector<4x1xf32> to vector<4x352xf32>
    %137 = arith.mulf %130, %136 : vector<4x352xf32>
    %138 = vector.broadcast %16 : f32 to vector<4x1xf32>
    %139 = arith.mulf %138, %119 : vector<4x1xf32>
    %140 = vector.broadcast %65 : f32 to vector<4x1xf32>
    %141 = arith.mulf %140, %121 : vector<4x1xf32>
    %142 = arith.addf %139, %141 : vector<4x1xf32>
    %143 = vector.broadcast %142 : vector<4x1xf32> to vector<4x352xf32>
    %144 = arith.mulf %130, %143 : vector<4x352xf32>
    %145 = vector.broadcast %23 : f32 to vector<4x1xf32>
    %146 = arith.mulf %145, %119 : vector<4x1xf32>
    %147 = vector.broadcast %72 : f32 to vector<4x1xf32>
    %148 = arith.mulf %147, %121 : vector<4x1xf32>
    %149 = arith.addf %146, %148 : vector<4x1xf32>
    %150 = vector.broadcast %149 : vector<4x1xf32> to vector<4x352xf32>
    %151 = arith.mulf %130, %150 : vector<4x352xf32>
    %152 = vector.broadcast %30 : f32 to vector<4x1xf32>
    %153 = arith.mulf %152, %119 : vector<4x1xf32>
    %154 = vector.broadcast %79 : f32 to vector<4x1xf32>
    %155 = arith.mulf %154, %121 : vector<4x1xf32>
    %156 = arith.addf %153, %155 : vector<4x1xf32>
    %157 = vector.broadcast %156 : vector<4x1xf32> to vector<4x352xf32>
    %158 = arith.mulf %130, %157 : vector<4x352xf32>
    %159 = vector.broadcast %37 : f32 to vector<4x1xf32>
    %160 = arith.mulf %159, %119 : vector<4x1xf32>
    %161 = vector.broadcast %86 : f32 to vector<4x1xf32>
    %162 = arith.mulf %161, %121 : vector<4x1xf32>
    %163 = arith.addf %160, %162 : vector<4x1xf32>
    %164 = vector.broadcast %163 : vector<4x1xf32> to vector<4x352xf32>
    %165 = arith.mulf %130, %164 : vector<4x352xf32>
    %166 = vector.broadcast %44 : f32 to vector<4x1xf32>
    %167 = arith.mulf %166, %119 : vector<4x1xf32>
    %168 = vector.broadcast %93 : f32 to vector<4x1xf32>
    %169 = arith.mulf %168, %121 : vector<4x1xf32>
    %170 = arith.addf %167, %169 : vector<4x1xf32>
    %171 = vector.broadcast %170 : vector<4x1xf32> to vector<4x352xf32>
    %172 = arith.mulf %130, %171 : vector<4x352xf32>
    %173 = vector.broadcast %51 : f32 to vector<4x1xf32>
    %174 = arith.mulf %173, %119 : vector<4x1xf32>
    %175 = vector.broadcast %100 : f32 to vector<4x1xf32>
    %176 = arith.mulf %175, %121 : vector<4x1xf32>
    %177 = arith.addf %174, %176 : vector<4x1xf32>
    %178 = vector.broadcast %177 : vector<4x1xf32> to vector<4x352xf32>
    %179 = arith.mulf %130, %178 : vector<4x352xf32>
    %cst_19 = arith.constant 2.000000e+00 : f32
    %180 = vector.broadcast %cst_19 : f32 to vector<4x352xf32>
    %181 = arith.cmpf oge, %114, %180 : vector<4x352xf32>
    %cst_20 = arith.constant 1.700000e+01 : f32
    %182 = vector.broadcast %cst_20 : f32 to vector<4x352xf32>
    %183 = arith.cmpf ole, %114, %182 : vector<4x352xf32>
    %184 = arith.andi %181, %183 : vector<4x352xi1>
    %185 = arith.extui %184 : vector<4x352xi1> to vector<4x352xi32>
    %186 = arith.sitofp %185 : vector<4x352xi32> to vector<4x352xf32>
    %c0_21 = arith.constant 0 : index
    %c1_22 = arith.constant 1 : index
    %187 = vector.load %arg4[%c0_21, %c1_22] : memref<4x358xf32, #tpu.memory_space<vmem>>, vector<4x352xf32>
    %188 = arith.mulf %187, %186 : vector<4x352xf32>
    %189 = vector.broadcast %10 : f32 to vector<4x1xf32>
    %190 = arith.mulf %189, %119 : vector<4x1xf32>
    %191 = vector.broadcast %59 : f32 to vector<4x1xf32>
    %192 = arith.mulf %191, %121 : vector<4x1xf32>
    %193 = arith.addf %190, %192 : vector<4x1xf32>
    %194 = vector.broadcast %193 : vector<4x1xf32> to vector<4x352xf32>
    %195 = arith.mulf %188, %194 : vector<4x352xf32>
    %196 = arith.addf %137, %195 : vector<4x352xf32>
    %197 = vector.broadcast %17 : f32 to vector<4x1xf32>
    %198 = arith.mulf %197, %119 : vector<4x1xf32>
    %199 = vector.broadcast %66 : f32 to vector<4x1xf32>
    %200 = arith.mulf %199, %121 : vector<4x1xf32>
    %201 = arith.addf %198, %200 : vector<4x1xf32>
    %202 = vector.broadcast %201 : vector<4x1xf32> to vector<4x352xf32>
    %203 = arith.mulf %188, %202 : vector<4x352xf32>
    %204 = arith.addf %144, %203 : vector<4x352xf32>
    %205 = vector.broadcast %24 : f32 to vector<4x1xf32>
    %206 = arith.mulf %205, %119 : vector<4x1xf32>
    %207 = vector.broadcast %73 : f32 to vector<4x1xf32>
    %208 = arith.mulf %207, %121 : vector<4x1xf32>
    %209 = arith.addf %206, %208 : vector<4x1xf32>
    %210 = vector.broadcast %209 : vector<4x1xf32> to vector<4x352xf32>
    %211 = arith.mulf %188, %210 : vector<4x352xf32>
    %212 = arith.addf %151, %211 : vector<4x352xf32>
    %213 = vector.broadcast %31 : f32 to vector<4x1xf32>
    %214 = arith.mulf %213, %119 : vector<4x1xf32>
    %215 = vector.broadcast %80 : f32 to vector<4x1xf32>
    %216 = arith.mulf %215, %121 : vector<4x1xf32>
    %217 = arith.addf %214, %216 : vector<4x1xf32>
    %218 = vector.broadcast %217 : vector<4x1xf32> to vector<4x352xf32>
    %219 = arith.mulf %188, %218 : vector<4x352xf32>
    %220 = arith.addf %158, %219 : vector<4x352xf32>
    %221 = vector.broadcast %38 : f32 to vector<4x1xf32>
    %222 = arith.mulf %221, %119 : vector<4x1xf32>
    %223 = vector.broadcast %87 : f32 to vector<4x1xf32>
    %224 = arith.mulf %223, %121 : vector<4x1xf32>
    %225 = arith.addf %222, %224 : vector<4x1xf32>
    %226 = vector.broadcast %225 : vector<4x1xf32> to vector<4x352xf32>
    %227 = arith.mulf %188, %226 : vector<4x352xf32>
    %228 = arith.addf %165, %227 : vector<4x352xf32>
    %229 = vector.broadcast %45 : f32 to vector<4x1xf32>
    %230 = arith.mulf %229, %119 : vector<4x1xf32>
    %231 = vector.broadcast %94 : f32 to vector<4x1xf32>
    %232 = arith.mulf %231, %121 : vector<4x1xf32>
    %233 = arith.addf %230, %232 : vector<4x1xf32>
    %234 = vector.broadcast %233 : vector<4x1xf32> to vector<4x352xf32>
    %235 = arith.mulf %188, %234 : vector<4x352xf32>
    %236 = arith.addf %172, %235 : vector<4x352xf32>
    %237 = vector.broadcast %52 : f32 to vector<4x1xf32>
    %238 = arith.mulf %237, %119 : vector<4x1xf32>
    %239 = vector.broadcast %101 : f32 to vector<4x1xf32>
    %240 = arith.mulf %239, %121 : vector<4x1xf32>
    %241 = arith.addf %238, %240 : vector<4x1xf32>
    %242 = vector.broadcast %241 : vector<4x1xf32> to vector<4x352xf32>
    %243 = arith.mulf %188, %242 : vector<4x352xf32>
    %244 = arith.addf %179, %243 : vector<4x352xf32>
    %cst_23 = arith.constant 1.000000e+00 : f32
    %245 = vector.broadcast %cst_23 : f32 to vector<4x352xf32>
    %246 = arith.cmpf oge, %114, %245 : vector<4x352xf32>
    %cst_24 = arith.constant 1.600000e+01 : f32
    %247 = vector.broadcast %cst_24 : f32 to vector<4x352xf32>
    %248 = arith.cmpf ole, %114, %247 : vector<4x352xf32>
    %249 = arith.andi %246, %248 : vector<4x352xi1>
    %250 = arith.extui %249 : vector<4x352xi1> to vector<4x352xi32>
    %251 = arith.sitofp %250 : vector<4x352xi32> to vector<4x352xf32>
    %c0_25 = arith.constant 0 : index
    %c2_26 = arith.constant 2 : index
    %252 = vector.load %arg4[%c0_25, %c2_26] : memref<4x358xf32, #tpu.memory_space<vmem>>, vector<4x352xf32>
    %253 = arith.mulf %252, %251 : vector<4x352xf32>
    %254 = vector.broadcast %11 : f32 to vector<4x1xf32>
    %255 = arith.mulf %254, %119 : vector<4x1xf32>
    %256 = vector.broadcast %60 : f32 to vector<4x1xf32>
    %257 = arith.mulf %256, %121 : vector<4x1xf32>
    %258 = arith.addf %255, %257 : vector<4x1xf32>
    %259 = vector.broadcast %258 : vector<4x1xf32> to vector<4x352xf32>
    %260 = arith.mulf %253, %259 : vector<4x352xf32>
    %261 = arith.addf %196, %260 : vector<4x352xf32>
    %262 = vector.broadcast %18 : f32 to vector<4x1xf32>
    %263 = arith.mulf %262, %119 : vector<4x1xf32>
    %264 = vector.broadcast %67 : f32 to vector<4x1xf32>
    %265 = arith.mulf %264, %121 : vector<4x1xf32>
    %266 = arith.addf %263, %265 : vector<4x1xf32>
    %267 = vector.broadcast %266 : vector<4x1xf32> to vector<4x352xf32>
    %268 = arith.mulf %253, %267 : vector<4x352xf32>
    %269 = arith.addf %204, %268 : vector<4x352xf32>
    %270 = vector.broadcast %25 : f32 to vector<4x1xf32>
    %271 = arith.mulf %270, %119 : vector<4x1xf32>
    %272 = vector.broadcast %74 : f32 to vector<4x1xf32>
    %273 = arith.mulf %272, %121 : vector<4x1xf32>
    %274 = arith.addf %271, %273 : vector<4x1xf32>
    %275 = vector.broadcast %274 : vector<4x1xf32> to vector<4x352xf32>
    %276 = arith.mulf %253, %275 : vector<4x352xf32>
    %277 = arith.addf %212, %276 : vector<4x352xf32>
    %278 = vector.broadcast %32 : f32 to vector<4x1xf32>
    %279 = arith.mulf %278, %119 : vector<4x1xf32>
    %280 = vector.broadcast %81 : f32 to vector<4x1xf32>
    %281 = arith.mulf %280, %121 : vector<4x1xf32>
    %282 = arith.addf %279, %281 : vector<4x1xf32>
    %283 = vector.broadcast %282 : vector<4x1xf32> to vector<4x352xf32>
    %284 = arith.mulf %253, %283 : vector<4x352xf32>
    %285 = arith.addf %220, %284 : vector<4x352xf32>
    %286 = vector.broadcast %39 : f32 to vector<4x1xf32>
    %287 = arith.mulf %286, %119 : vector<4x1xf32>
    %288 = vector.broadcast %88 : f32 to vector<4x1xf32>
    %289 = arith.mulf %288, %121 : vector<4x1xf32>
    %290 = arith.addf %287, %289 : vector<4x1xf32>
    %291 = vector.broadcast %290 : vector<4x1xf32> to vector<4x352xf32>
    %292 = arith.mulf %253, %291 : vector<4x352xf32>
    %293 = arith.addf %228, %292 : vector<4x352xf32>
    %294 = vector.broadcast %46 : f32 to vector<4x1xf32>
    %295 = arith.mulf %294, %119 : vector<4x1xf32>
    %296 = vector.broadcast %95 : f32 to vector<4x1xf32>
    %297 = arith.mulf %296, %121 : vector<4x1xf32>
    %298 = arith.addf %295, %297 : vector<4x1xf32>
    %299 = vector.broadcast %298 : vector<4x1xf32> to vector<4x352xf32>
    %300 = arith.mulf %253, %299 : vector<4x352xf32>
    %301 = arith.addf %236, %300 : vector<4x352xf32>
    %302 = vector.broadcast %53 : f32 to vector<4x1xf32>
    %303 = arith.mulf %302, %119 : vector<4x1xf32>
    %304 = vector.broadcast %102 : f32 to vector<4x1xf32>
    %305 = arith.mulf %304, %121 : vector<4x1xf32>
    %306 = arith.addf %303, %305 : vector<4x1xf32>
    %307 = vector.broadcast %306 : vector<4x1xf32> to vector<4x352xf32>
    %308 = arith.mulf %253, %307 : vector<4x352xf32>
    %309 = arith.addf %244, %308 : vector<4x352xf32>
    %cst_27 = arith.constant 0.000000e+00 : f32
    %310 = vector.broadcast %cst_27 : f32 to vector<4x352xf32>
    %311 = arith.cmpf oge, %114, %310 : vector<4x352xf32>
    %cst_28 = arith.constant 1.500000e+01 : f32
    %312 = vector.broadcast %cst_28 : f32 to vector<4x352xf32>
    %313 = arith.cmpf ole, %114, %312 : vector<4x352xf32>
    %314 = arith.andi %311, %313 : vector<4x352xi1>
    %315 = arith.extui %314 : vector<4x352xi1> to vector<4x352xi32>
    %316 = arith.sitofp %315 : vector<4x352xi32> to vector<4x352xf32>
    %c0_29 = arith.constant 0 : index
    %c3_30 = arith.constant 3 : index
    %317 = vector.load %arg4[%c0_29, %c3_30] : memref<4x358xf32, #tpu.memory_space<vmem>>, vector<4x352xf32>
    %318 = arith.mulf %317, %316 : vector<4x352xf32>
    %319 = vector.broadcast %12 : f32 to vector<4x1xf32>
    %320 = arith.mulf %319, %119 : vector<4x1xf32>
    %321 = vector.broadcast %61 : f32 to vector<4x1xf32>
    %322 = arith.mulf %321, %121 : vector<4x1xf32>
    %323 = arith.addf %320, %322 : vector<4x1xf32>
    %324 = vector.broadcast %323 : vector<4x1xf32> to vector<4x352xf32>
    %325 = arith.mulf %318, %324 : vector<4x352xf32>
    %326 = arith.addf %261, %325 : vector<4x352xf32>
    %327 = vector.broadcast %19 : f32 to vector<4x1xf32>
    %328 = arith.mulf %327, %119 : vector<4x1xf32>
    %329 = vector.broadcast %68 : f32 to vector<4x1xf32>
    %330 = arith.mulf %329, %121 : vector<4x1xf32>
    %331 = arith.addf %328, %330 : vector<4x1xf32>
    %332 = vector.broadcast %331 : vector<4x1xf32> to vector<4x352xf32>
    %333 = arith.mulf %318, %332 : vector<4x352xf32>
    %334 = arith.addf %269, %333 : vector<4x352xf32>
    %335 = vector.broadcast %26 : f32 to vector<4x1xf32>
    %336 = arith.mulf %335, %119 : vector<4x1xf32>
    %337 = vector.broadcast %75 : f32 to vector<4x1xf32>
    %338 = arith.mulf %337, %121 : vector<4x1xf32>
    %339 = arith.addf %336, %338 : vector<4x1xf32>
    %340 = vector.broadcast %339 : vector<4x1xf32> to vector<4x352xf32>
    %341 = arith.mulf %318, %340 : vector<4x352xf32>
    %342 = arith.addf %277, %341 : vector<4x352xf32>
    %343 = vector.broadcast %33 : f32 to vector<4x1xf32>
    %344 = arith.mulf %343, %119 : vector<4x1xf32>
    %345 = vector.broadcast %82 : f32 to vector<4x1xf32>
    %346 = arith.mulf %345, %121 : vector<4x1xf32>
    %347 = arith.addf %344, %346 : vector<4x1xf32>
    %348 = vector.broadcast %347 : vector<4x1xf32> to vector<4x352xf32>
    %349 = arith.mulf %318, %348 : vector<4x352xf32>
    %350 = arith.addf %285, %349 : vector<4x352xf32>
    %351 = vector.broadcast %40 : f32 to vector<4x1xf32>
    %352 = arith.mulf %351, %119 : vector<4x1xf32>
    %353 = vector.broadcast %89 : f32 to vector<4x1xf32>
    %354 = arith.mulf %353, %121 : vector<4x1xf32>
    %355 = arith.addf %352, %354 : vector<4x1xf32>
    %356 = vector.broadcast %355 : vector<4x1xf32> to vector<4x352xf32>
    %357 = arith.mulf %318, %356 : vector<4x352xf32>
    %358 = arith.addf %293, %357 : vector<4x352xf32>
    %359 = vector.broadcast %47 : f32 to vector<4x1xf32>
    %360 = arith.mulf %359, %119 : vector<4x1xf32>
    %361 = vector.broadcast %96 : f32 to vector<4x1xf32>
    %362 = arith.mulf %361, %121 : vector<4x1xf32>
    %363 = arith.addf %360, %362 : vector<4x1xf32>
    %364 = vector.broadcast %363 : vector<4x1xf32> to vector<4x352xf32>
    %365 = arith.mulf %318, %364 : vector<4x352xf32>
    %366 = arith.addf %301, %365 : vector<4x352xf32>
    %367 = vector.broadcast %54 : f32 to vector<4x1xf32>
    %368 = arith.mulf %367, %119 : vector<4x1xf32>
    %369 = vector.broadcast %103 : f32 to vector<4x1xf32>
    %370 = arith.mulf %369, %121 : vector<4x1xf32>
    %371 = arith.addf %368, %370 : vector<4x1xf32>
    %372 = vector.broadcast %371 : vector<4x1xf32> to vector<4x352xf32>
    %373 = arith.mulf %318, %372 : vector<4x352xf32>
    %374 = arith.addf %309, %373 : vector<4x352xf32>
    %cst_31 = arith.constant -1.000000e+00 : f32
    %375 = vector.broadcast %cst_31 : f32 to vector<4x352xf32>
    %376 = arith.cmpf oge, %114, %375 : vector<4x352xf32>
    %cst_32 = arith.constant 1.400000e+01 : f32
    %377 = vector.broadcast %cst_32 : f32 to vector<4x352xf32>
    %378 = arith.cmpf ole, %114, %377 : vector<4x352xf32>
    %379 = arith.andi %376, %378 : vector<4x352xi1>
    %380 = arith.extui %379 : vector<4x352xi1> to vector<4x352xi32>
    %381 = arith.sitofp %380 : vector<4x352xi32> to vector<4x352xf32>
    %c0_33 = arith.constant 0 : index
    %c4_34 = arith.constant 4 : index
    %382 = vector.load %arg4[%c0_33, %c4_34] : memref<4x358xf32, #tpu.memory_space<vmem>>, vector<4x352xf32>
    %383 = arith.mulf %382, %381 : vector<4x352xf32>
    %384 = vector.broadcast %13 : f32 to vector<4x1xf32>
    %385 = arith.mulf %384, %119 : vector<4x1xf32>
    %386 = vector.broadcast %62 : f32 to vector<4x1xf32>
    %387 = arith.mulf %386, %121 : vector<4x1xf32>
    %388 = arith.addf %385, %387 : vector<4x1xf32>
    %389 = vector.broadcast %388 : vector<4x1xf32> to vector<4x352xf32>
    %390 = arith.mulf %383, %389 : vector<4x352xf32>
    %391 = arith.addf %326, %390 : vector<4x352xf32>
    %392 = vector.broadcast %20 : f32 to vector<4x1xf32>
    %393 = arith.mulf %392, %119 : vector<4x1xf32>
    %394 = vector.broadcast %69 : f32 to vector<4x1xf32>
    %395 = arith.mulf %394, %121 : vector<4x1xf32>
    %396 = arith.addf %393, %395 : vector<4x1xf32>
    %397 = vector.broadcast %396 : vector<4x1xf32> to vector<4x352xf32>
    %398 = arith.mulf %383, %397 : vector<4x352xf32>
    %399 = arith.addf %334, %398 : vector<4x352xf32>
    %400 = vector.broadcast %27 : f32 to vector<4x1xf32>
    %401 = arith.mulf %400, %119 : vector<4x1xf32>
    %402 = vector.broadcast %76 : f32 to vector<4x1xf32>
    %403 = arith.mulf %402, %121 : vector<4x1xf32>
    %404 = arith.addf %401, %403 : vector<4x1xf32>
    %405 = vector.broadcast %404 : vector<4x1xf32> to vector<4x352xf32>
    %406 = arith.mulf %383, %405 : vector<4x352xf32>
    %407 = arith.addf %342, %406 : vector<4x352xf32>
    %408 = vector.broadcast %34 : f32 to vector<4x1xf32>
    %409 = arith.mulf %408, %119 : vector<4x1xf32>
    %410 = vector.broadcast %83 : f32 to vector<4x1xf32>
    %411 = arith.mulf %410, %121 : vector<4x1xf32>
    %412 = arith.addf %409, %411 : vector<4x1xf32>
    %413 = vector.broadcast %412 : vector<4x1xf32> to vector<4x352xf32>
    %414 = arith.mulf %383, %413 : vector<4x352xf32>
    %415 = arith.addf %350, %414 : vector<4x352xf32>
    %416 = vector.broadcast %41 : f32 to vector<4x1xf32>
    %417 = arith.mulf %416, %119 : vector<4x1xf32>
    %418 = vector.broadcast %90 : f32 to vector<4x1xf32>
    %419 = arith.mulf %418, %121 : vector<4x1xf32>
    %420 = arith.addf %417, %419 : vector<4x1xf32>
    %421 = vector.broadcast %420 : vector<4x1xf32> to vector<4x352xf32>
    %422 = arith.mulf %383, %421 : vector<4x352xf32>
    %423 = arith.addf %358, %422 : vector<4x352xf32>
    %424 = vector.broadcast %48 : f32 to vector<4x1xf32>
    %425 = arith.mulf %424, %119 : vector<4x1xf32>
    %426 = vector.broadcast %97 : f32 to vector<4x1xf32>
    %427 = arith.mulf %426, %121 : vector<4x1xf32>
    %428 = arith.addf %425, %427 : vector<4x1xf32>
    %429 = vector.broadcast %428 : vector<4x1xf32> to vector<4x352xf32>
    %430 = arith.mulf %383, %429 : vector<4x352xf32>
    %431 = arith.addf %366, %430 : vector<4x352xf32>
    %432 = vector.broadcast %55 : f32 to vector<4x1xf32>
    %433 = arith.mulf %432, %119 : vector<4x1xf32>
    %434 = vector.broadcast %104 : f32 to vector<4x1xf32>
    %435 = arith.mulf %434, %121 : vector<4x1xf32>
    %436 = arith.addf %433, %435 : vector<4x1xf32>
    %437 = vector.broadcast %436 : vector<4x1xf32> to vector<4x352xf32>
    %438 = arith.mulf %383, %437 : vector<4x352xf32>
    %439 = arith.addf %374, %438 : vector<4x352xf32>
    %cst_35 = arith.constant -2.000000e+00 : f32
    %440 = vector.broadcast %cst_35 : f32 to vector<4x352xf32>
    %441 = arith.cmpf oge, %114, %440 : vector<4x352xf32>
    %cst_36 = arith.constant 1.300000e+01 : f32
    %442 = vector.broadcast %cst_36 : f32 to vector<4x352xf32>
    %443 = arith.cmpf ole, %114, %442 : vector<4x352xf32>
    %444 = arith.andi %441, %443 : vector<4x352xi1>
    %445 = arith.extui %444 : vector<4x352xi1> to vector<4x352xi32>
    %446 = arith.sitofp %445 : vector<4x352xi32> to vector<4x352xf32>
    %c0_37 = arith.constant 0 : index
    %c5_38 = arith.constant 5 : index
    %447 = vector.load %arg4[%c0_37, %c5_38] : memref<4x358xf32, #tpu.memory_space<vmem>>, vector<4x352xf32>
    %448 = arith.mulf %447, %446 : vector<4x352xf32>
    %449 = vector.broadcast %14 : f32 to vector<4x1xf32>
    %450 = arith.mulf %449, %119 : vector<4x1xf32>
    %451 = vector.broadcast %63 : f32 to vector<4x1xf32>
    %452 = arith.mulf %451, %121 : vector<4x1xf32>
    %453 = arith.addf %450, %452 : vector<4x1xf32>
    %454 = vector.broadcast %453 : vector<4x1xf32> to vector<4x352xf32>
    %455 = arith.mulf %448, %454 : vector<4x352xf32>
    %456 = arith.addf %391, %455 : vector<4x352xf32>
    %457 = vector.broadcast %21 : f32 to vector<4x1xf32>
    %458 = arith.mulf %457, %119 : vector<4x1xf32>
    %459 = vector.broadcast %70 : f32 to vector<4x1xf32>
    %460 = arith.mulf %459, %121 : vector<4x1xf32>
    %461 = arith.addf %458, %460 : vector<4x1xf32>
    %462 = vector.broadcast %461 : vector<4x1xf32> to vector<4x352xf32>
    %463 = arith.mulf %448, %462 : vector<4x352xf32>
    %464 = arith.addf %399, %463 : vector<4x352xf32>
    %465 = vector.broadcast %28 : f32 to vector<4x1xf32>
    %466 = arith.mulf %465, %119 : vector<4x1xf32>
    %467 = vector.broadcast %77 : f32 to vector<4x1xf32>
    %468 = arith.mulf %467, %121 : vector<4x1xf32>
    %469 = arith.addf %466, %468 : vector<4x1xf32>
    %470 = vector.broadcast %469 : vector<4x1xf32> to vector<4x352xf32>
    %471 = arith.mulf %448, %470 : vector<4x352xf32>
    %472 = arith.addf %407, %471 : vector<4x352xf32>
    %473 = vector.broadcast %35 : f32 to vector<4x1xf32>
    %474 = arith.mulf %473, %119 : vector<4x1xf32>
    %475 = vector.broadcast %84 : f32 to vector<4x1xf32>
    %476 = arith.mulf %475, %121 : vector<4x1xf32>
    %477 = arith.addf %474, %476 : vector<4x1xf32>
    %478 = vector.broadcast %477 : vector<4x1xf32> to vector<4x352xf32>
    %479 = arith.mulf %448, %478 : vector<4x352xf32>
    %480 = arith.addf %415, %479 : vector<4x352xf32>
    %481 = vector.broadcast %42 : f32 to vector<4x1xf32>
    %482 = arith.mulf %481, %119 : vector<4x1xf32>
    %483 = vector.broadcast %91 : f32 to vector<4x1xf32>
    %484 = arith.mulf %483, %121 : vector<4x1xf32>
    %485 = arith.addf %482, %484 : vector<4x1xf32>
    %486 = vector.broadcast %485 : vector<4x1xf32> to vector<4x352xf32>
    %487 = arith.mulf %448, %486 : vector<4x352xf32>
    %488 = arith.addf %423, %487 : vector<4x352xf32>
    %489 = vector.broadcast %49 : f32 to vector<4x1xf32>
    %490 = arith.mulf %489, %119 : vector<4x1xf32>
    %491 = vector.broadcast %98 : f32 to vector<4x1xf32>
    %492 = arith.mulf %491, %121 : vector<4x1xf32>
    %493 = arith.addf %490, %492 : vector<4x1xf32>
    %494 = vector.broadcast %493 : vector<4x1xf32> to vector<4x352xf32>
    %495 = arith.mulf %448, %494 : vector<4x352xf32>
    %496 = arith.addf %431, %495 : vector<4x352xf32>
    %497 = vector.broadcast %56 : f32 to vector<4x1xf32>
    %498 = arith.mulf %497, %119 : vector<4x1xf32>
    %499 = vector.broadcast %105 : f32 to vector<4x1xf32>
    %500 = arith.mulf %499, %121 : vector<4x1xf32>
    %501 = arith.addf %498, %500 : vector<4x1xf32>
    %502 = vector.broadcast %501 : vector<4x1xf32> to vector<4x352xf32>
    %503 = arith.mulf %448, %502 : vector<4x352xf32>
    %504 = arith.addf %439, %503 : vector<4x352xf32>
    %cst_39 = arith.constant -3.000000e+00 : f32
    %505 = vector.broadcast %cst_39 : f32 to vector<4x352xf32>
    %506 = arith.cmpf oge, %114, %505 : vector<4x352xf32>
    %cst_40 = arith.constant 1.200000e+01 : f32
    %507 = vector.broadcast %cst_40 : f32 to vector<4x352xf32>
    %508 = arith.cmpf ole, %114, %507 : vector<4x352xf32>
    %509 = arith.andi %506, %508 : vector<4x352xi1>
    %510 = arith.extui %509 : vector<4x352xi1> to vector<4x352xi32>
    %511 = arith.sitofp %510 : vector<4x352xi32> to vector<4x352xf32>
    %c0_41 = arith.constant 0 : index
    %c6_42 = arith.constant 6 : index
    %512 = vector.load %arg4[%c0_41, %c6_42] : memref<4x358xf32, #tpu.memory_space<vmem>>, vector<4x352xf32>
    %513 = arith.mulf %512, %511 : vector<4x352xf32>
    %514 = vector.broadcast %15 : f32 to vector<4x1xf32>
    %515 = arith.mulf %514, %119 : vector<4x1xf32>
    %516 = vector.broadcast %64 : f32 to vector<4x1xf32>
    %517 = arith.mulf %516, %121 : vector<4x1xf32>
    %518 = arith.addf %515, %517 : vector<4x1xf32>
    %519 = vector.broadcast %518 : vector<4x1xf32> to vector<4x352xf32>
    %520 = arith.mulf %513, %519 : vector<4x352xf32>
    %521 = arith.addf %456, %520 : vector<4x352xf32>
    %522 = vector.broadcast %22 : f32 to vector<4x1xf32>
    %523 = arith.mulf %522, %119 : vector<4x1xf32>
    %524 = vector.broadcast %71 : f32 to vector<4x1xf32>
    %525 = arith.mulf %524, %121 : vector<4x1xf32>
    %526 = arith.addf %523, %525 : vector<4x1xf32>
    %527 = vector.broadcast %526 : vector<4x1xf32> to vector<4x352xf32>
    %528 = arith.mulf %513, %527 : vector<4x352xf32>
    %529 = arith.addf %464, %528 : vector<4x352xf32>
    %530 = vector.broadcast %29 : f32 to vector<4x1xf32>
    %531 = arith.mulf %530, %119 : vector<4x1xf32>
    %532 = vector.broadcast %78 : f32 to vector<4x1xf32>
    %533 = arith.mulf %532, %121 : vector<4x1xf32>
    %534 = arith.addf %531, %533 : vector<4x1xf32>
    %535 = vector.broadcast %534 : vector<4x1xf32> to vector<4x352xf32>
    %536 = arith.mulf %513, %535 : vector<4x352xf32>
    %537 = arith.addf %472, %536 : vector<4x352xf32>
    %538 = vector.broadcast %36 : f32 to vector<4x1xf32>
    %539 = arith.mulf %538, %119 : vector<4x1xf32>
    %540 = vector.broadcast %85 : f32 to vector<4x1xf32>
    %541 = arith.mulf %540, %121 : vector<4x1xf32>
    %542 = arith.addf %539, %541 : vector<4x1xf32>
    %543 = vector.broadcast %542 : vector<4x1xf32> to vector<4x352xf32>
    %544 = arith.mulf %513, %543 : vector<4x352xf32>
    %545 = arith.addf %480, %544 : vector<4x352xf32>
    %546 = vector.broadcast %43 : f32 to vector<4x1xf32>
    %547 = arith.mulf %546, %119 : vector<4x1xf32>
    %548 = vector.broadcast %92 : f32 to vector<4x1xf32>
    %549 = arith.mulf %548, %121 : vector<4x1xf32>
    %550 = arith.addf %547, %549 : vector<4x1xf32>
    %551 = vector.broadcast %550 : vector<4x1xf32> to vector<4x352xf32>
    %552 = arith.mulf %513, %551 : vector<4x352xf32>
    %553 = arith.addf %488, %552 : vector<4x352xf32>
    %554 = vector.broadcast %50 : f32 to vector<4x1xf32>
    %555 = arith.mulf %554, %119 : vector<4x1xf32>
    %556 = vector.broadcast %99 : f32 to vector<4x1xf32>
    %557 = arith.mulf %556, %121 : vector<4x1xf32>
    %558 = arith.addf %555, %557 : vector<4x1xf32>
    %559 = vector.broadcast %558 : vector<4x1xf32> to vector<4x352xf32>
    %560 = arith.mulf %513, %559 : vector<4x352xf32>
    %561 = arith.addf %496, %560 : vector<4x352xf32>
    %562 = vector.broadcast %57 : f32 to vector<4x1xf32>
    %563 = arith.mulf %562, %119 : vector<4x1xf32>
    %564 = vector.broadcast %106 : f32 to vector<4x1xf32>
    %565 = arith.mulf %564, %121 : vector<4x1xf32>
    %566 = arith.addf %563, %565 : vector<4x1xf32>
    %567 = vector.broadcast %566 : vector<4x1xf32> to vector<4x352xf32>
    %568 = arith.mulf %513, %567 : vector<4x352xf32>
    %569 = arith.addf %504, %568 : vector<4x352xf32>
    %570 = vector.extract_strided_slice %521 {offsets = [0, 0], sizes = [4, 256], strides = [1, 1]} : vector<4x352xf32> to vector<4x256xf32>
    %571 = vector.extract_strided_slice %529 {offsets = [0, 16], sizes = [4, 256], strides = [1, 1]} : vector<4x352xf32> to vector<4x256xf32>
    %572 = vector.extract_strided_slice %537 {offsets = [0, 32], sizes = [4, 256], strides = [1, 1]} : vector<4x352xf32> to vector<4x256xf32>
    %573 = vector.extract_strided_slice %545 {offsets = [0, 48], sizes = [4, 256], strides = [1, 1]} : vector<4x352xf32> to vector<4x256xf32>
    %574 = vector.extract_strided_slice %553 {offsets = [0, 64], sizes = [4, 256], strides = [1, 1]} : vector<4x352xf32> to vector<4x256xf32>
    %575 = vector.extract_strided_slice %561 {offsets = [0, 80], sizes = [4, 256], strides = [1, 1]} : vector<4x352xf32> to vector<4x256xf32>
    %576 = vector.extract_strided_slice %569 {offsets = [0, 96], sizes = [4, 256], strides = [1, 1]} : vector<4x352xf32> to vector<4x256xf32>
    %577 = arith.addf %570, %571 : vector<4x256xf32>
    %578 = arith.addf %572, %573 : vector<4x256xf32>
    %579 = arith.addf %574, %575 : vector<4x256xf32>
    %580 = arith.addf %577, %578 : vector<4x256xf32>
    %581 = arith.addf %579, %576 : vector<4x256xf32>
    %582 = arith.addf %580, %581 : vector<4x256xf32>
    %583 = vector.extract_strided_slice %582 {offsets = [0, 0], sizes = [2, 256], strides = [1, 1]} : vector<4x256xf32> to vector<2x256xf32>
    %584 = vector.extract_strided_slice %582 {offsets = [2, 0], sizes = [2, 256], strides = [1, 1]} : vector<4x256xf32> to vector<2x256xf32>
    %585 = arith.addf %583, %584 : vector<2x256xf32>
    %586 = arith.negf %585 : vector<2x256xf32>
    %587 = math.exp %586 : vector<2x256xf32>
    %cst_43 = arith.constant 1.000000e+00 : f32
    %588 = vector.broadcast %cst_43 : f32 to vector<2x256xf32>
    %589 = arith.addf %588, %587 : vector<2x256xf32>
    %590 = arith.divf %588, %589 : vector<2x256xf32>
    %c0_44 = arith.constant 0 : index
    %c0_45 = arith.constant 0 : index
    %c0_46 = arith.constant 0 : index
    %591 = vector.load %arg1[%c0_44, %c0_45, %c0_46] : memref<2x4x256xf32, #tpu.memory_space<vmem>>, vector<2x4x256xf32>
    %592 = vector.shape_cast %590 : vector<2x256xf32> to vector<2x1x256xf32>
    %593 = vector.broadcast %592 : vector<2x1x256xf32> to vector<2x4x256xf32>
    %594 = arith.mulf %591, %593 : vector<2x4x256xf32>
    %c0_47 = arith.constant 0 : index
    %c0_48 = arith.constant 0 : index
    %c0_49 = arith.constant 0 : index
    %595 = vector.load %arg3[%c0_47, %c0_48, %c0_49] : memref<2x4x256xf32, #tpu.memory_space<vmem>>, vector<2x4x256xf32>
    tpu.vector_store %arg3[%c0_47, %c0_48, %c0_49], %594 {strides = array<i32>} : memref<2x4x256xf32, #tpu.memory_space<vmem>>, vector<2x4x256xf32>,
    return
  }
  func.func @transform_0(%arg0: i32) -> (i32, i32, i32) {
    %c0_i32 = arith.constant 0 : i32
    %c0_i32_0 = arith.constant 0 : i32
    %c0_i32_1 = arith.constant 0 : i32
    return %arg0, %c0_i32, %c0_i32_0 : i32, i32, i32
  }
  func.func @transform_1(%arg0: i32) -> i32 {
    %c0_i32 = arith.constant 0 : i32
    %c0_i32_0 = arith.constant 0 : i32
    return %c0_i32 : i32
  }
  func.func @transform_2(%arg0: i32) -> (i32, i32, i32) {
    %c0_i32 = arith.constant 0 : i32
    %c0_i32_0 = arith.constant 0 : i32
    %c0_i32_1 = arith.constant 0 : i32
    return %arg0, %c0_i32, %c0_i32_0 : i32, i32, i32
  }
}

</mosaic_0001>

<llo_original>
// kernel: tpu_custom_call.1
$region0: #{tpu_custom_call.1}
  #allocation0 [shape = 'u32[]', space=smem, size = 0x4, offset = 0x4, fixed_abs, tag = 'smem constant byte address 0x4 - core index']
  #allocation1 [shape = 'u32[144,128]{1,0:T(1,128)}', space=vmem, size = 0x12000, scoped, tag = 'internal scratch']
  #allocation2 [shape = 'f32[4,358]{1,0:T(4,128)}', space=vmem, size = 0x1800, scoped, tag = 'scratch operand']
  %s0 = inlined_call_operand.hbm [shape: f32[2,4,256], index: 0, kind: input, shape index: {}]
  %s1 = inlined_call_operand.vmem [shape: f32[98], index: 1, kind: input, shape index: {}]
  %s2 = inlined_call_operand.hbm [shape: f32[2,4,256], index: 2, kind: output, shape index: {}]
  %s3 = sld [smem:[#allocation0]]
  $region26: #{tpu_custom_call.1} parent=0
    _
  %s5 = ssub.s32 1, %s3
  %s6 = scalar_select 0, %s5, %s3
  $region1: #{tpu_custom_call.1} parent=0
    #allocation3 [shape = 'u8[8192]{0}', space=vmem, size = 0x2000, scoped, tag = 'input window, operand 0, single buffered']
    #allocation4 [shape = 's32[1]{0}', space=sflag, size = 0x4, scoped, tag = 'scoped memory for tpu_custom_call.1']
    #allocation5 [shape = 's32[1]{0}', space=sflag, size = 0x4, scoped, tag = 'scoped memory for tpu_custom_call.1']
    #allocation6 [shape = 's32[1]{0}', space=sflag, size = 0x4, scoped, tag = 'scoped memory for tpu_custom_call.1']
    #allocation7 [shape = 'u8[512]{0}', space=smem, size = 0x200, scoped, tag = 'input window, operand 1, single buffered']
    #allocation8 [shape = 'u8[8192]{0}', space=vmem, size = 0x2000, scoped, tag = 'output window, operand 0, single buffered']
    %7 = vsyncpa [#allocation4], 0
    %8 = vsyncpa [#allocation6], 0
    %9 = vsyncpa [#allocation5], 0
    // Predicated region
    $region2: #{tpu_custom_call.1} parent=1 // pred_check
      _
    $region3: #{tpu_custom_call.1} parent=1 // pred_check_branch
      %11 = sbr.rel (0) target = $region5
    $region4: #{tpu_custom_call.1} parent=1 // pred_region
      %s13 = ssub.s32 256, 256
      %14 = vsyncadd [#allocation4], %s13
      %s15 = sshll.u32 [#allocation3], 4
      %s16 = int_to_ptr.vmem [resolvable:$true] %s15
      %21 = dma.hbm_to_vmem [thread:$0]  %s0, 256, %s16, [#allocation4], 128, 128, 8
    $region5: #{tpu_custom_call.1} parent=1 // pred_fallthru
      _
    // Predicated region
    $region6: #{tpu_custom_call.1} parent=1 // pred_check
      _
    $region7: #{tpu_custom_call.1} parent=1 // pred_check_branch
      %23 = sbr.rel (0) target = $region9
    $region8: #{tpu_custom_call.1} parent=1 // pred_region
      %s25 = ssub.s32 16, 16
      %26 = vsyncadd [#allocation6], %s25
      %s28 = sshll.u32 %s1, 4
      %s29 = int_to_ptr.vmem [resolvable:$true] %s28
      %31 = dma.vmem_to_smem %s29, 16, [#allocation7], [#allocation6]
    $region9: #{tpu_custom_call.1} parent=1 // pred_fallthru
      _
    // Predicated region
    $region10: #{tpu_custom_call.1} parent=1 // pred_check
      _
    $region11: #{tpu_custom_call.1} parent=1 // pred_check_branch
      %33 = sbr.rel (0) target = $region13
    $region12: #{tpu_custom_call.1} parent=1 // pred_region
      %34 = dma.done [#allocation4], 256
    $region13: #{tpu_custom_call.1} parent=1 // pred_fallthru
      _
    // Predicated region
    $region14: #{tpu_custom_call.1} parent=1 // pred_check
      _
    $region15: #{tpu_custom_call.1} parent=1 // pred_check_branch
      %36 = sbr.rel (0) target = $region17
    $region16: #{tpu_custom_call.1} parent=1 // pred_region
      %37 = dma.done [#allocation6], 16
    $region17: #{tpu_custom_call.1} parent=1 // pred_fallthru
      _
    %38 = sfence
    %v39 = vld [vmem:[#allocation3] sm:$0xff]
    %v40 = vld [vmem:[#allocation3 + $0x8] sm:$0xff]
    %v43 = vcombine.high %v39, %v39
    %v44 = vcombine.high %v40, %v40
    %vm47 = vcmask 1043456
    %v48 = vsel %vm47, %v39, 0.0
    %v49 = vrot.slane %v48, 4
    %v50 = vadd.f32 %v48, %v49
    %v51 = vrot.slane %v50, 2
    %v52 = vadd.f32 %v50, %v51
    %v53 = vrot.slane %v52, 1
    %v54 = vadd.f32 %v52, %v53
    %v55 = vsel %vm47, %v43, 0.0
    %v56 = vrot.slane %v55, 4
    %v57 = vadd.f32 %v55, %v56
    %v58 = vrot.slane %v57, 2
    %v59 = vadd.f32 %v57, %v58
    %v60 = vrot.slane %v59, 1
    %v61 = vadd.f32 %v59, %v60
    %v62 = vsel %vm47, %v40, 0.0
    %v63 = vrot.slane %v62, 4
    %v64 = vadd.f32 %v62, %v63
    %v65 = vrot.slane %v64, 2
    %v66 = vadd.f32 %v64, %v65
    %v67 = vrot.slane %v66, 1
    %v68 = vadd.f32 %v66, %v67
    %v69 = vsel %vm47, %v44, 0.0
    %v70 = vrot.slane %v69, 4
    %v71 = vadd.f32 %v69, %v70
    %v72 = vrot.slane %v71, 2
    %v73 = vadd.f32 %v71, %v72
    %v74 = vrot.slane %v73, 1
    %v75 = vadd.f32 %v73, %v74
    %v76 = vmul.f32 %v54, 0.25
    %v77 = vmul.f32 %v61, 0.25
    %v78 = vmul.f32 %v68, 0.25
    %v79 = vmul.f32 %v75, 0.25
    %v80 = vsel %vm47, %v39, -inf
    %v81 = vrot.slane %v80, 4
    %v82 = vmax.f32 %v80, %v81
    %v83 = vrot.slane %v82, 2
    %v84 = vmax.f32 %v82, %v83
    %v85 = vrot.slane %v84, 1
    %v86 = vmax.f32 %v84, %v85
    %v87 = vsel %vm47, %v43, -inf
    %v88 = vrot.slane %v87, 4
    %v89 = vmax.f32 %v87, %v88
    %v90 = vrot.slane %v89, 2
    %v91 = vmax.f32 %v89, %v90
    %v92 = vrot.slane %v91, 1
    %v93 = vmax.f32 %v91, %v92
    %v94 = vsel %vm47, %v40, -inf
    %v95 = vrot.slane %v94, 4
    %v96 = vmax.f32 %v94, %v95
    %v97 = vrot.slane %v96, 2
    %v98 = vmax.f32 %v96, %v97
    %v99 = vrot.slane %v98, 1
    %v100 = vmax.f32 %v98, %v99
    %v101 = vsel %vm47, %v44, -inf
    %v102 = vrot.slane %v101, 4
    %v103 = vmax.f32 %v101, %v102
    %v104 = vrot.slane %v103, 2
    %v105 = vmax.f32 %v103, %v104
    %v106 = vrot.slane %v105, 1
    %v107 = vmax.f32 %v105, %v106
    %108 = vst [vmem:[#allocation2] sm:$0xff] 0.0
    %vm109 = vcmask 830464
    %110 = vst.msk [vmem:[#allocation2 + $0x8] sm:$0xf] %vm109, 0.0
    %v115 = vcombine.low %v76, %v77
    %v116 = vcombine.low %v78, %v79
    %v117 = vrot.slane %v116, 7
    %vm118 = vcmask 1041409
    %v119 = vsel %vm118, %v117, %v115
    %vm120 = vcmask 1045509
    %v121 = vsel %vm120, %v117, %v119
    %122 = vrot.lane.b32.xlu0 %v121, 51
    %v123 = vpop.permute.xlu0 %122
    %v124 = vrot.slane %v123, 4
    %vm125 = vcmask 416768
    %v126 = vsel %vm125, %v124, %v123
    %vm129 = vcmask 1041816
    %vm130 = vcmask 1045508
    %vm131 = vmor %vm130, %vm129
    %132 = vst.msk [vmem:[#allocation2] sm:$0x33] %vm131, %v126
    %vm133 = vcmask 410624
    %134 = vst.msk [vmem:[#allocation2 + $0x8] sm:$0x3] %vm133, %v124
    %v139 = vcombine.low %v86, %v93
    %v140 = vcombine.low %v100, %v107
    %v141 = vrot.slane %v139, 6
    %v142 = vrot.slane %v140, 5
    %vm143 = vcmask 1043459
    %v144 = vsel %vm143, %v142, %v141
    %vm145 = vcmask 1047559
    %v146 = vsel %vm145, %v142, %v144
    %147 = vrot.lane.b32.xlu0 %v146, 51
    %v148 = vpop.permute.xlu0 %147
    %v149 = vrot.slane %v148, 4
    %v150 = vsel %vm125, %v149, %v148
    %vm153 = vcmask 1043866
    %vm154 = vcmask 1047558
    %vm155 = vmor %vm154, %vm153
    %156 = vst.msk [vmem:[#allocation2] sm:$0xcc] %vm155, %v150
    %vm157 = vcmask 412674
    %158 = vst.msk [vmem:[#allocation2 + $0x8] sm:$0xc] %vm157, %v149
    %s159 = sld [smem:[#allocation7]]
    %s160 = sld [smem:[#allocation7 + $0x1]]
    %s161 = sld [smem:[#allocation7 + $0x2]]
    %s162 = sld [smem:[#allocation7 + $0x3]]
    %s163 = sld [smem:[#allocation7 + $0x4]]
    %s164 = sld [smem:[#allocation7 + $0x5]]
    %s165 = sld [smem:[#allocation7 + $0x6]]
    %s166 = sld [smem:[#allocation7 + $0x7]]
    %s167 = sld [smem:[#allocation7 + $0x8]]
    %s168 = sld [smem:[#allocation7 + $0x9]]
    %s169 = sld [smem:[#allocation7 + $0xa]]
    %s170 = sld [smem:[#allocation7 + $0xb]]
    %s171 = sld [smem:[#allocation7 + $0xc]]
    %s172 = sld [smem:[#allocation7 + $0xd]]
    %s173 = sld [smem:[#allocation7 + $0xe]]
    %s174 = sld [smem:[#allocation7 + $0xf]]
    %s175 = sld [smem:[#allocation7 + $0x10]]
    %s176 = sld [smem:[#allocation7 + $0x11]]
    %s177 = sld [smem:[#allocation7 + $0x12]]
    %s178 = sld [smem:[#allocation7 + $0x13]]
    %s179 = sld [smem:[#allocation7 + $0x14]]
    %s180 = sld [smem:[#allocation7 + $0x15]]
    %s181 = sld [smem:[#allocation7 + $0x16]]
    %s182 = sld [smem:[#allocation7 + $0x17]]
    %s183 = sld [smem:[#allocation7 + $0x18]]
    %s184 = sld [smem:[#allocation7 + $0x19]]
    %s185 = sld [smem:[#allocation7 + $0x1a]]
    %s186 = sld [smem:[#allocation7 + $0x1b]]
    %s187 = sld [smem:[#allocation7 + $0x1c]]
    %s188 = sld [smem:[#allocation7 + $0x1d]]
    %s189 = sld [smem:[#allocation7 + $0x1e]]
    %s190 = sld [smem:[#allocation7 + $0x1f]]
    %s191 = sld [smem:[#allocation7 + $0x20]]
    %s192 = sld [smem:[#allocation7 + $0x21]]
    %s193 = sld [smem:[#allocation7 + $0x22]]
    %s194 = sld [smem:[#allocation7 + $0x23]]
    %s195 = sld [smem:[#allocation7 + $0x24]]
    %s196 = sld [smem:[#allocation7 + $0x25]]
    %s197 = sld [smem:[#allocation7 + $0x26]]
    %s198 = sld [smem:[#allocation7 + $0x27]]
    %s199 = sld [smem:[#allocation7 + $0x28]]
    %s200 = sld [smem:[#allocation7 + $0x29]]
    %s201 = sld [smem:[#allocation7 + $0x2a]]
    %s202 = sld [smem:[#allocation7 + $0x2b]]
    %s203 = sld [smem:[#allocation7 + $0x2c]]
    %s204 = sld [smem:[#allocation7 + $0x2d]]
    %s205 = sld [smem:[#allocation7 + $0x2e]]
    %s206 = sld [smem:[#allocation7 + $0x2f]]
    %s207 = sld [smem:[#allocation7 + $0x30]]
    %s208 = sld [smem:[#allocation7 + $0x31]]
    %s209 = sld [smem:[#allocation7 + $0x32]]
    %s210 = sld [smem:[#allocation7 + $0x33]]
    %s211 = sld [smem:[#allocation7 + $0x34]]
    %s212 = sld [smem:[#allocation7 + $0x35]]
    %s213 = sld [smem:[#allocation7 + $0x36]]
    %s214 = sld [smem:[#allocation7 + $0x37]]
    %s215 = sld [smem:[#allocation7 + $0x38]]
    %s216 = sld [smem:[#allocation7 + $0x39]]
    %s217 = sld [smem:[#allocation7 + $0x3a]]
    %s218 = sld [smem:[#allocation7 + $0x3b]]
    %s219 = sld [smem:[#allocation7 + $0x3c]]
    %s220 = sld [smem:[#allocation7 + $0x3d]]
    %s221 = sld [smem:[#allocation7 + $0x3e]]
    %s222 = sld [smem:[#allocation7 + $0x3f]]
    %s223 = sld [smem:[#allocation7 + $0x40]]
    %s224 = sld [smem:[#allocation7 + $0x41]]
    %s225 = sld [smem:[#allocation7 + $0x42]]
    %s226 = sld [smem:[#allocation7 + $0x43]]
    %s227 = sld [smem:[#allocation7 + $0x44]]
    %s228 = sld [smem:[#allocation7 + $0x45]]
    %s229 = sld [smem:[#allocation7 + $0x46]]
    %s230 = sld [smem:[#allocation7 + $0x47]]
    %s231 = sld [smem:[#allocation7 + $0x48]]
    %s232 = sld [smem:[#allocation7 + $0x49]]
    %s233 = sld [smem:[#allocation7 + $0x4a]]
    %s234 = sld [smem:[#allocation7 + $0x4b]]
    %s235 = sld [smem:[#allocation7 + $0x4c]]
    %s236 = sld [smem:[#allocation7 + $0x4d]]
    %s237 = sld [smem:[#allocation7 + $0x4e]]
    %s238 = sld [smem:[#allocation7 + $0x4f]]
    %s239 = sld [smem:[#allocation7 + $0x50]]
    %s240 = sld [smem:[#allocation7 + $0x51]]
    %s241 = sld [smem:[#allocation7 + $0x52]]
    %s242 = sld [smem:[#allocation7 + $0x53]]
    %s243 = sld [smem:[#allocation7 + $0x54]]
    %s244 = sld [smem:[#allocation7 + $0x55]]
    %s245 = sld [smem:[#allocation7 + $0x56]]
    %s246 = sld [smem:[#allocation7 + $0x57]]
    %s247 = sld [smem:[#allocation7 + $0x58]]
    %s248 = sld [smem:[#allocation7 + $0x59]]
    %s249 = sld [smem:[#allocation7 + $0x5a]]
    %s250 = sld [smem:[#allocation7 + $0x5b]]
    %s251 = sld [smem:[#allocation7 + $0x5c]]
    %s252 = sld [smem:[#allocation7 + $0x5d]]
    %s253 = sld [smem:[#allocation7 + $0x5e]]
    %s254 = sld [smem:[#allocation7 + $0x5f]]
    %s255 = sld [smem:[#allocation7 + $0x60]]
    %s256 = sld [smem:[#allocation7 + $0x61]]
    %v257 = vlaneseq
    %v258 = vand.u32 %v257, 127
    %v259 = vadd.s32 %v258, 128
    %v260 = vadd.s32 %v258, 256
    %v261 = vcvt.s32.f32 %v258
    %v262 = vcvt.s32.f32 %v259
    %v263 = vcvt.s32.f32 %v260
    %v264 = vrcp.pop 16.0
    %v265 = vmul.f32 %v261, %v264
    %v266 = vmul.f32 %v262, %v264
    %v267 = vmul.f32 %v263, %v264
    %v268 = vfloor.f32 %v265
    %v269 = vfloor.f32 %v266
    %v270 = vfloor.f32 %v267
    %v271 = vmul.f32 %v268, 16.0
    %v272 = vmul.f32 %v269, 16.0
    %v273 = vmul.f32 %v270, 16.0
    %v274 = vsub.f32 %v261, %v271
    %v275 = vsub.f32 %v262, %v272
    %v276 = vsub.f32 %v263, %v273
    %v277 = vlaneseq
    %v278 = vshrl.u32 %v277, 7
    %vm279 = vcmp.lt.s32.totalorder %v278, 2
    %v280 = vsel %vm279, 1, 0
    %v281 = vcvt.s32.f32 %v280
    %v282 = vsub.f32 1.0, %v281
    %vm283 = vcmp.ge.f32.partialorder %v274, 3.0
    %vm284 = vcmp.ge.f32.partialorder %v275, 3.0
    %vm285 = vcmp.ge.f32.partialorder %v276, 3.0
    %vm286 = vcmp.le.f32.partialorder %v274, 18.0
    %vm287 = vcmp.le.f32.partialorder %v275, 18.0
    %vm288 = vcmp.le.f32.partialorder %v276, 18.0
    %vm289 = vmand %vm283, %vm286
    %vm290 = vmand %vm284, %vm287
    %vm291 = vmand %vm285, %vm288
    %v292 = vsel %vm289, 1, 0
    %v293 = vsel %vm290, 1, 0
    %v294 = vsel %vm291, 1, 0
    %v295 = vcvt.s32.f32 %v292
    %v296 = vcvt.s32.f32 %v293
    %v297 = vcvt.s32.f32 %v294
    %v298 = vld [vmem:[#allocation2] sm:$0xff]
    %v299 = vld [vmem:[#allocation2 + $0x8] sm:$0xf]
    %v302 = vcombine.low %v295, %v296
    %v304 = vmul.f32 %v298, %v302
    %v305 = vmul.f32 %v299, %v297
    %v306 = vstv %s159
    %v307 = vmul.f32 %v306, %v281
    %v308 = vstv %s208
    %v309 = vmul.f32 %v308, %v282
    %v310 = vadd.f32 %v307, %v309
    %v313 = vunpack.c.l.s4 839922192
    %v314 = vunpack.c.0.s8 %v313
    %v315 = vlaneseq
    %v316 = vshrl.u32 %v315, 7
    %v317 = vsub.s32 %v314, %v316
    %v318 = vrot.slane %v310, %v317
    %v320 = vmul.f32 %v304, %v318
    %v321 = vstv %s166
    %v322 = vmul.f32 %v321, %v281
    %v323 = vstv %s215
    %v324 = vmul.f32 %v323, %v282
    %v325 = vadd.f32 %v322, %v324
    %v328 = vunpack.c.l.s4 839922192
    %v329 = vunpack.c.0.s8 %v328
    %v330 = vlaneseq
    %v331 = vshrl.u32 %v330, 7
    %v332 = vsub.s32 %v329, %v331
    %v333 = vrot.slane %v325, %v332
    %v335 = vmul.f32 %v304, %v333
    %v336 = vmul.f32 %v305, %v333
    %v337 = vstv %s173
    %v338 = vmul.f32 %v337, %v281
    %v339 = vstv %s222
    %v340 = vmul.f32 %v339, %v282
    %v341 = vadd.f32 %v338, %v340
    %v344 = vunpack.c.l.s4 839922192
    %v345 = vunpack.c.0.s8 %v344
    %v346 = vlaneseq
    %v347 = vshrl.u32 %v346, 7
    %v348 = vsub.s32 %v345, %v347
    %v349 = vrot.slane %v341, %v348
    %v351 = vmul.f32 %v304, %v349
    %v352 = vmul.f32 %v305, %v349
    %v353 = vstv %s180
    %v354 = vmul.f32 %v353, %v281
    %v355 = vstv %s229
    %v356 = vmul.f32 %v355, %v282
    %v357 = vadd.f32 %v354, %v356
    %v360 = vunpack.c.l.s4 839922192
    %v361 = vunpack.c.0.s8 %v360
    %v362 = vlaneseq
    %v363 = vshrl.u32 %v362, 7
    %v364 = vsub.s32 %v361, %v363
    %v365 = vrot.slane %v357, %v364
    %v367 = vmul.f32 %v304, %v365
    %v368 = vmul.f32 %v305, %v365
    %v369 = vstv %s187
    %v370 = vmul.f32 %v369, %v281
    %v371 = vstv %s236
    %v372 = vmul.f32 %v371, %v282
    %v373 = vadd.f32 %v370, %v372
    %v376 = vunpack.c.l.s4 839922192
    %v377 = vunpack.c.0.s8 %v376
    %v378 = vlaneseq
    %v379 = vshrl.u32 %v378, 7
    %v380 = vsub.s32 %v377, %v379
    %v381 = vrot.slane %v373, %v380
    %v383 = vmul.f32 %v304, %v381
    %v384 = vmul.f32 %v305, %v381
    %v385 = vstv %s194
    %v386 = vmul.f32 %v385, %v281
    %v387 = vstv %s243
    %v388 = vmul.f32 %v387, %v282
    %v389 = vadd.f32 %v386, %v388
    %v392 = vunpack.c.l.s4 839922192
    %v393 = vunpack.c.0.s8 %v392
    %v394 = vlaneseq
    %v395 = vshrl.u32 %v394, 7
    %v396 = vsub.s32 %v393, %v395
    %v397 = vrot.slane %v389, %v396
    %v399 = vmul.f32 %v304, %v397
    %v400 = vmul.f32 %v305, %v397
    %v401 = vstv %s201
    %v402 = vmul.f32 %v401, %v281
    %v403 = vstv %s250
    %v404 = vmul.f32 %v403, %v282
    %v405 = vadd.f32 %v402, %v404
    %v408 = vunpack.c.l.s4 839922192
    %v409 = vunpack.c.0.s8 %v408
    %v410 = vlaneseq
    %v411 = vshrl.u32 %v410, 7
    %v412 = vsub.s32 %v409, %v411
    %v413 = vrot.slane %v405, %v412
    %v415 = vmul.f32 %v304, %v413
    %v416 = vmul.f32 %v305, %v413
    %vm417 = vcmp.ge.f32.partialorder %v274, 2.0
    %vm418 = vcmp.ge.f32.partialorder %v275, 2.0
    %vm419 = vcmp.ge.f32.partialorder %v276, 2.0
    %vm420 = vcmp.le.f32.partialorder %v274, 17.0
    %vm421 = vcmp.le.f32.partialorder %v275, 17.0
    %vm422 = vcmp.le.f32.partialorder %v276, 17.0
    %vm423 = vmand %vm417, %vm420
    %vm424 = vmand %vm418, %vm421
    %vm425 = vmand %vm419, %vm422
    %v426 = vsel %vm423, 1, 0
    %v427 = vsel %vm424, 1, 0
    %v428 = vsel %vm425, 1, 0
    %v429 = vcvt.s32.f32 %v426
    %v430 = vcvt.s32.f32 %v427
    %v431 = vcvt.s32.f32 %v428
    %v435 = vcombine.low %v429, %v430
    %436 = vrot.lane.b32.xlu0 %v435, 1
    %v437 = vpop.permute.xlu0 %436
    %438 = vrot.lane.b32.xlu0 %v431, 1
    %v439 = vpop.permute.xlu0 %438
    %v440 = vrot.slane %v437, 4
    %vm441 = vcmask 7168
    %v442 = vsel %vm441, %v440, %v437
    %v443 = vsel %vm441, %v440, %v439
    %v446 = vmul.f32 %v298, %v442
    %v447 = vmul.f32 %v299, %v443
    %v448 = vstv %s160
    %v449 = vmul.f32 %v448, %v281
    %v450 = vstv %s209
    %v451 = vmul.f32 %v450, %v282
    %v452 = vadd.f32 %v449, %v451
    %v455 = vunpack.c.l.s4 839922192
    %v456 = vunpack.c.0.s8 %v455
    %v457 = vlaneseq
    %v458 = vshrl.u32 %v457, 7
    %v459 = vsub.s32 %v456, %v458
    %v460 = vrot.slane %v452, %v459
    %v462 = vmul.f32 %v446, %v460
    %v463 = vmul.f32 %v447, %v460
    %466 = vrot.lane.b32.xlu0 %v462, 127
    %v467 = vpop.permute.xlu0 %466
    %468 = vrot.lane.b32.xlu0 %v463, 127
    %v469 = vpop.permute.xlu0 %468
    %v470 = vrot.slane %v467, 4
    %v471 = vrot.slane %v469, 4
    %v472 = vsel %vm47, %v470, %v471
    %vm473 = vcmask 1039360
    %v474 = vsel %vm473, %v467, %v472
    %v476 = vadd.f32 %v320, %v474
    %v477 = vstv %s167
    %v478 = vmul.f32 %v477, %v281
    %v479 = vstv %s216
    %v480 = vmul.f32 %v479, %v282
    %v481 = vadd.f32 %v478, %v480
    %v484 = vunpack.c.l.s4 839922192
    %v485 = vunpack.c.0.s8 %v484
    %v486 = vlaneseq
    %v487 = vshrl.u32 %v486, 7
    %v488 = vsub.s32 %v485, %v487
    %v489 = vrot.slane %v481, %v488
    %v491 = vmul.f32 %v446, %v489
    %v492 = vmul.f32 %v447, %v489
    %495 = vrot.lane.b32.xlu0 %v491, 127
    %v496 = vpop.permute.xlu0 %495
    %497 = vrot.lane.b32.xlu0 %v492, 127
    %v498 = vpop.permute.xlu0 %497
    %v499 = vrot.slane %v496, 4
    %v500 = vrot.slane %v498, 4
    %v501 = vsel %vm47, %v499, %v500
    %v502 = vsel %vm473, %v496, %v501
    %v505 = vadd.f32 %v335, %v502
    %v506 = vadd.f32 %v336, %v498
    %v507 = vstv %s174
    %v508 = vmul.f32 %v507, %v281
    %v509 = vstv %s223
    %v510 = vmul.f32 %v509, %v282
    %v511 = vadd.f32 %v508, %v510
    %v514 = vunpack.c.l.s4 839922192
    %v515 = vunpack.c.0.s8 %v514
    %v516 = vlaneseq
    %v517 = vshrl.u32 %v516, 7
    %v518 = vsub.s32 %v515, %v517
    %v519 = vrot.slane %v511, %v518
    %v521 = vmul.f32 %v446, %v519
    %v522 = vmul.f32 %v447, %v519
    %525 = vrot.lane.b32.xlu0 %v521, 127
    %v526 = vpop.permute.xlu0 %525
    %527 = vrot.lane.b32.xlu0 %v522, 127
    %v528 = vpop.permute.xlu0 %527
    %v529 = vrot.slane %v526, 4
    %v530 = vrot.slane %v528, 4
    %v531 = vsel %vm47, %v529, %v530
    %v532 = vsel %vm473, %v526, %v531
    %v535 = vadd.f32 %v351, %v532
    %v536 = vadd.f32 %v352, %v528
    %v537 = vstv %s181
    %v538 = vmul.f32 %v537, %v281
    %v539 = vstv %s230
    %v540 = vmul.f32 %v539, %v282
    %v541 = vadd.f32 %v538, %v540
    %v544 = vunpack.c.l.s4 839922192
    %v545 = vunpack.c.0.s8 %v544
    %v546 = vlaneseq
    %v547 = vshrl.u32 %v546, 7
    %v548 = vsub.s32 %v545, %v547
    %v549 = vrot.slane %v541, %v548
    %v551 = vmul.f32 %v446, %v549
    %v552 = vmul.f32 %v447, %v549
    %555 = vrot.lane.b32.xlu0 %v551, 127
    %v556 = vpop.permute.xlu0 %555
    %557 = vrot.lane.b32.xlu0 %v552, 127
    %v558 = vpop.permute.xlu0 %557
    %v559 = vrot.slane %v556, 4
    %v560 = vrot.slane %v558, 4
    %v561 = vsel %vm47, %v559, %v560
    %v562 = vsel %vm473, %v556, %v561
    %v565 = vadd.f32 %v367, %v562
    %v566 = vadd.f32 %v368, %v558
    %v567 = vstv %s188
    %v568 = vmul.f32 %v567, %v281
    %v569 = vstv %s237
    %v570 = vmul.f32 %v569, %v282
    %v571 = vadd.f32 %v568, %v570
    %v574 = vunpack.c.l.s4 839922192
    %v575 = vunpack.c.0.s8 %v574
    %v576 = vlaneseq
    %v577 = vshrl.u32 %v576, 7
    %v578 = vsub.s32 %v575, %v577
    %v579 = vrot.slane %v571, %v578
    %v581 = vmul.f32 %v446, %v579
    %v582 = vmul.f32 %v447, %v579
    %585 = vrot.lane.b32.xlu0 %v581, 127
    %v586 = vpop.permute.xlu0 %585
    %587 = vrot.lane.b32.xlu0 %v582, 127
    %v588 = vpop.permute.xlu0 %587
    %v589 = vrot.slane %v586, 4
    %v590 = vrot.slane %v588, 4
    %v591 = vsel %vm47, %v589, %v590
    %v592 = vsel %vm473, %v586, %v591
    %v595 = vadd.f32 %v383, %v592
    %v596 = vadd.f32 %v384, %v588
    %v597 = vstv %s195
    %v598 = vmul.f32 %v597, %v281
    %v599 = vstv %s244
    %v600 = vmul.f32 %v599, %v282
    %v601 = vadd.f32 %v598, %v600
    %v604 = vunpack.c.l.s4 839922192
    %v605 = vunpack.c.0.s8 %v604
    %v606 = vlaneseq
    %v607 = vshrl.u32 %v606, 7
    %v608 = vsub.s32 %v605, %v607
    %v609 = vrot.slane %v601, %v608
    %v611 = vmul.f32 %v446, %v609
    %v612 = vmul.f32 %v447, %v609
    %615 = vrot.lane.b32.xlu0 %v611, 127
    %v616 = vpop.permute.xlu0 %615
    %617 = vrot.lane.b32.xlu0 %v612, 127
    %v618 = vpop.permute.xlu0 %617
    %v619 = vrot.slane %v616, 4
    %v620 = vrot.slane %v618, 4
    %v621 = vsel %vm47, %v619, %v620
    %v622 = vsel %vm473, %v616, %v621
    %v625 = vadd.f32 %v399, %v622
    %v626 = vadd.f32 %v400, %v618
    %v627 = vstv %s202
    %v628 = vmul.f32 %v627, %v281
    %v629 = vstv %s251
    %v630 = vmul.f32 %v629, %v282
    %v631 = vadd.f32 %v628, %v630
    %v634 = vunpack.c.l.s4 839922192
    %v635 = vunpack.c.0.s8 %v634
    %v636 = vlaneseq
    %v637 = vshrl.u32 %v636, 7
    %v638 = vsub.s32 %v635, %v637
    %v639 = vrot.slane %v631, %v638
    %v641 = vmul.f32 %v446, %v639
    %v642 = vmul.f32 %v447, %v639
    %645 = vrot.lane.b32.xlu0 %v641, 127
    %v646 = vpop.permute.xlu0 %645
    %647 = vrot.lane.b32.xlu0 %v642, 127
    %v648 = vpop.permute.xlu0 %647
    %v649 = vrot.slane %v646, 4
    %v650 = vrot.slane %v648, 4
    %v651 = vsel %vm47, %v649, %v650
    %v652 = vsel %vm473, %v646, %v651
    %v655 = vadd.f32 %v415, %v652
    %v656 = vadd.f32 %v416, %v648
    %vm657 = vcmp.ge.f32.partialorder %v274, 1.0
    %vm658 = vcmp.ge.f32.partialorder %v275, 1.0
    %vm659 = vcmp.ge.f32.partialorder %v276, 1.0
    %vm660 = vcmp.le.f32.partialorder %v274, 16.0
    %vm661 = vcmp.le.f32.partialorder %v275, 16.0
    %vm662 = vcmp.le.f32.partialorder %v276, 16.0
    %vm663 = vmand %vm657, %vm660
    %vm664 = vmand %vm658, %vm661
    %vm665 = vmand %vm659, %vm662
    %v666 = vsel %vm663, 1, 0
    %v667 = vsel %vm664, 1, 0
    %v668 = vsel %vm665, 1, 0
    %v669 = vcvt.s32.f32 %v666
    %v670 = vcvt.s32.f32 %v667
    %v671 = vcvt.s32.f32 %v668
    %v675 = vcombine.low %v669, %v670
    %676 = vrot.lane.b32.xlu0 %v675, 2
    %v677 = vpop.permute.xlu0 %676
    %678 = vrot.lane.b32.xlu0 %v671, 2
    %v679 = vpop.permute.xlu0 %678
    %v680 = vrot.slane %v677, 4
    %vm681 = vcmask 15360
    %v682 = vsel %vm681, %v680, %v677
    %v683 = vsel %vm681, %v680, %v679
    %v686 = vmul.f32 %v298, %v682
    %v687 = vmul.f32 %v299, %v683
    %v688 = vstv %s161
    %v689 = vmul.f32 %v688, %v281
    %v690 = vstv %s210
    %v691 = vmul.f32 %v690, %v282
    %v692 = vadd.f32 %v689, %v691
    %v695 = vunpack.c.l.s4 839922192
    %v696 = vunpack.c.0.s8 %v695
    %v697 = vlaneseq
    %v698 = vshrl.u32 %v697, 7
    %v699 = vsub.s32 %v696, %v698
    %v700 = vrot.slane %v692, %v699
    %v702 = vmul.f32 %v686, %v700
    %v703 = vmul.f32 %v687, %v700
    %706 = vrot.lane.b32.xlu0 %v702, 126
    %v707 = vpop.permute.xlu0 %706
    %708 = vrot.lane.b32.xlu0 %v703, 126
    %v709 = vpop.permute.xlu0 %708
    %v710 = vrot.slane %v707, 4
    %v711 = vrot.slane %v709, 4
    %v712 = vsel %vm47, %v710, %v711
    %vm713 = vcmask 1031168
    %v714 = vsel %vm713, %v707, %v712
    %v716 = vadd.f32 %v476, %v714
    %v717 = vstv %s168
    %v718 = vmul.f32 %v717, %v281
    %v719 = vstv %s217
    %v720 = vmul.f32 %v719, %v282
    %v721 = vadd.f32 %v718, %v720
    %v724 = vunpack.c.l.s4 839922192
    %v725 = vunpack.c.0.s8 %v724
    %v726 = vlaneseq
    %v727 = vshrl.u32 %v726, 7
    %v728 = vsub.s32 %v725, %v727
    %v729 = vrot.slane %v721, %v728
    %v731 = vmul.f32 %v686, %v729
    %v732 = vmul.f32 %v687, %v729
    %735 = vrot.lane.b32.xlu0 %v731, 126
    %v736 = vpop.permute.xlu0 %735
    %737 = vrot.lane.b32.xlu0 %v732, 126
    %v738 = vpop.permute.xlu0 %737
    %v739 = vrot.slane %v736, 4
    %v740 = vrot.slane %v738, 4
    %v741 = vsel %vm47, %v739, %v740
    %v742 = vsel %vm713, %v736, %v741
    %v745 = vadd.f32 %v505, %v742
    %v746 = vadd.f32 %v506, %v738
    %v747 = vstv %s175
    %v748 = vmul.f32 %v747, %v281
    %v749 = vstv %s224
    %v750 = vmul.f32 %v749, %v282
    %v751 = vadd.f32 %v748, %v750
    %v754 = vunpack.c.l.s4 839922192
    %v755 = vunpack.c.0.s8 %v754
    %v756 = vlaneseq
    %v757 = vshrl.u32 %v756, 7
    %v758 = vsub.s32 %v755, %v757
    %v759 = vrot.slane %v751, %v758
    %v761 = vmul.f32 %v686, %v759
    %v762 = vmul.f32 %v687, %v759
    %765 = vrot.lane.b32.xlu0 %v761, 126
    %v766 = vpop.permute.xlu0 %765
    %767 = vrot.lane.b32.xlu0 %v762, 126
    %v768 = vpop.permute.xlu0 %767
    %v769 = vrot.slane %v766, 4
    %v770 = vrot.slane %v768, 4
    %v771 = vsel %vm47, %v769, %v770
    %v772 = vsel %vm713, %v766, %v771
    %v775 = vadd.f32 %v535, %v772
    %v776 = vadd.f32 %v536, %v768
    %v777 = vstv %s182
    %v778 = vmul.f32 %v777, %v281
    %v779 = vstv %s231
    %v780 = vmul.f32 %v779, %v282
    %v781 = vadd.f32 %v778, %v780
    %v784 = vunpack.c.l.s4 839922192
    %v785 = vunpack.c.0.s8 %v784
    %v786 = vlaneseq
    %v787 = vshrl.u32 %v786, 7
    %v788 = vsub.s32 %v785, %v787
    %v789 = vrot.slane %v781, %v788
    %v791 = vmul.f32 %v686, %v789
    %v792 = vmul.f32 %v687, %v789
    %795 = vrot.lane.b32.xlu0 %v791, 126
    %v796 = vpop.permute.xlu0 %795
    %797 = vrot.lane.b32.xlu0 %v792, 126
    %v798 = vpop.permute.xlu0 %797
    %v799 = vrot.slane %v796, 4
    %v800 = vrot.slane %v798, 4
    %v801 = vsel %vm47, %v799, %v800
    %v802 = vsel %vm713, %v796, %v801
    %v805 = vadd.f32 %v565, %v802
    %v806 = vadd.f32 %v566, %v798
    %v807 = vstv %s189
    %v808 = vmul.f32 %v807, %v281
    %v809 = vstv %s238
    %v810 = vmul.f32 %v809, %v282
    %v811 = vadd.f32 %v808, %v810
    %v814 = vunpack.c.l.s4 839922192
    %v815 = vunpack.c.0.s8 %v814
    %v816 = vlaneseq
    %v817 = vshrl.u32 %v816, 7
    %v818 = vsub.s32 %v815, %v817
    %v819 = vrot.slane %v811, %v818
    %v821 = vmul.f32 %v686, %v819
    %v822 = vmul.f32 %v687, %v819
    %825 = vrot.lane.b32.xlu0 %v821, 126
    %v826 = vpop.permute.xlu0 %825
    %827 = vrot.lane.b32.xlu0 %v822, 126
    %v828 = vpop.permute.xlu0 %827
    %v829 = vrot.slane %v826, 4
    %v830 = vrot.slane %v828, 4
    %v831 = vsel %vm47, %v829, %v830
    %v832 = vsel %vm713, %v826, %v831
    %v835 = vadd.f32 %v595, %v832
    %v836 = vadd.f32 %v596, %v828
    %v837 = vstv %s196
    %v838 = vmul.f32 %v837, %v281
    %v839 = vstv %s245
    %v840 = vmul.f32 %v839, %v282
    %v841 = vadd.f32 %v838, %v840
    %v844 = vunpack.c.l.s4 839922192
    %v845 = vunpack.c.0.s8 %v844
    %v846 = vlaneseq
    %v847 = vshrl.u32 %v846, 7
    %v848 = vsub.s32 %v845, %v847
    %v849 = vrot.slane %v841, %v848
    %v851 = vmul.f32 %v686, %v849
    %v852 = vmul.f32 %v687, %v849
    %855 = vrot.lane.b32.xlu0 %v851, 126
    %v856 = vpop.permute.xlu0 %855
    %857 = vrot.lane.b32.xlu0 %v852, 126
    %v858 = vpop.permute.xlu0 %857
    %v859 = vrot.slane %v856, 4
    %v860 = vrot.slane %v858, 4
    %v861 = vsel %vm47, %v859, %v860
    %v862 = vsel %vm713, %v856, %v861
    %v865 = vadd.f32 %v625, %v862
    %v866 = vadd.f32 %v626, %v858
    %v867 = vstv %s203
    %v868 = vmul.f32 %v867, %v281
    %v869 = vstv %s252
    %v870 = vmul.f32 %v869, %v282
    %v871 = vadd.f32 %v868, %v870
    %v874 = vunpack.c.l.s4 839922192
    %v875 = vunpack.c.0.s8 %v874
    %v876 = vlaneseq
    %v877 = vshrl.u32 %v876, 7
    %v878 = vsub.s32 %v875, %v877
    %v879 = vrot.slane %v871, %v878
    %v881 = vmul.f32 %v686, %v879
    %v882 = vmul.f32 %v687, %v879
    %885 = vrot.lane.b32.xlu0 %v881, 126
    %v886 = vpop.permute.xlu0 %885
    %887 = vrot.lane.b32.xlu0 %v882, 126
    %v888 = vpop.permute.xlu0 %887
    %v889 = vrot.slane %v886, 4
    %v890 = vrot.slane %v888, 4
    %v891 = vsel %vm47, %v889, %v890
    %v892 = vsel %vm713, %v886, %v891
    %v895 = vadd.f32 %v655, %v892
    %v896 = vadd.f32 %v656, %v888
    %vm897 = vcmp.ge.f32.partialorder %v274, 0.0
    %vm898 = vcmp.ge.f32.partialorder %v275, 0.0
    %vm899 = vcmp.ge.f32.partialorder %v276, 0.0
    %vm900 = vcmp.le.f32.partialorder %v274, 15.0
    %vm901 = vcmp.le.f32.partialorder %v275, 15.0
    %vm902 = vcmp.le.f32.partialorder %v276, 15.0
    %vm903 = vmand %vm897, %vm900
    %vm904 = vmand %vm898, %vm901
    %vm905 = vmand %vm899, %vm902
    %v906 = vsel %vm903, 1, 0
    %v907 = vsel %vm904, 1, 0
    %v908 = vsel %vm905, 1, 0
    %v909 = vcvt.s32.f32 %v906
    %v910 = vcvt.s32.f32 %v907
    %v911 = vcvt.s32.f32 %v908
    %v915 = vcombine.low %v909, %v910
    %916 = vrot.lane.b32.xlu0 %v915, 3
    %v917 = vpop.permute.xlu0 %916
    %918 = vrot.lane.b32.xlu0 %v911, 3
    %v919 = vpop.permute.xlu0 %918
    %v920 = vrot.slane %v917, 4
    %vm921 = vcmask 23552
    %v922 = vsel %vm921, %v920, %v917
    %v923 = vsel %vm921, %v920, %v919
    %v926 = vmul.f32 %v298, %v922
    %v927 = vmul.f32 %v299, %v923
    %v928 = vstv %s162
    %v929 = vmul.f32 %v928, %v281
    %v930 = vstv %s211
    %v931 = vmul.f32 %v930, %v282
    %v932 = vadd.f32 %v929, %v931
    %v935 = vunpack.c.l.s4 839922192
    %v936 = vunpack.c.0.s8 %v935
    %v937 = vlaneseq
    %v938 = vshrl.u32 %v937, 7
    %v939 = vsub.s32 %v936, %v938
    %v940 = vrot.slane %v932, %v939
    %v942 = vmul.f32 %v926, %v940
    %v943 = vmul.f32 %v927, %v940
    %946 = vrot.lane.b32.xlu0 %v942, 125
    %v947 = vpop.permute.xlu0 %946
    %948 = vrot.lane.b32.xlu0 %v943, 125
    %v949 = vpop.permute.xlu0 %948
    %v950 = vrot.slane %v947, 4
    %v951 = vrot.slane %v949, 4
    %v952 = vsel %vm47, %v950, %v951
    %vm953 = vcmask 1022976
    %v954 = vsel %vm953, %v947, %v952
    %v956 = vadd.f32 %v716, %v954
    %v957 = vstv %s169
    %v958 = vmul.f32 %v957, %v281
    %v959 = vstv %s218
    %v960 = vmul.f32 %v959, %v282
    %v961 = vadd.f32 %v958, %v960
    %v964 = vunpack.c.l.s4 839922192
    %v965 = vunpack.c.0.s8 %v964
    %v966 = vlaneseq
    %v967 = vshrl.u32 %v966, 7
    %v968 = vsub.s32 %v965, %v967
    %v969 = vrot.slane %v961, %v968
    %v971 = vmul.f32 %v926, %v969
    %v972 = vmul.f32 %v927, %v969
    %975 = vrot.lane.b32.xlu0 %v971, 125
    %v976 = vpop.permute.xlu0 %975
    %977 = vrot.lane.b32.xlu0 %v972, 125
    %v978 = vpop.permute.xlu0 %977
    %v979 = vrot.slane %v976, 4
    %v980 = vrot.slane %v978, 4
    %v981 = vsel %vm47, %v979, %v980
    %v982 = vsel %vm953, %v976, %v981
    %v985 = vadd.f32 %v745, %v982
    %v986 = vadd.f32 %v746, %v978
    %v987 = vstv %s176
    %v988 = vmul.f32 %v987, %v281
    %v989 = vstv %s225
    %v990 = vmul.f32 %v989, %v282
    %v991 = vadd.f32 %v988, %v990
    %v994 = vunpack.c.l.s4 839922192
    %v995 = vunpack.c.0.s8 %v994
    %v996 = vlaneseq
    %v997 = vshrl.u32 %v996, 7
    %v998 = vsub.s32 %v995, %v997
    %v999 = vrot.slane %v991, %v998
    %v1001 = vmul.f32 %v926, %v999
    %v1002 = vmul.f32 %v927, %v999
    %1005 = vrot.lane.b32.xlu0 %v1001, 125
    %v1006 = vpop.permute.xlu0 %1005
    %1007 = vrot.lane.b32.xlu0 %v1002, 125
    %v1008 = vpop.permute.xlu0 %1007
    %v1009 = vrot.slane %v1006, 4
    %v1010 = vrot.slane %v1008, 4
    %v1011 = vsel %vm47, %v1009, %v1010
    %v1012 = vsel %vm953, %v1006, %v1011
    %v1015 = vadd.f32 %v775, %v1012
    %v1016 = vadd.f32 %v776, %v1008
    %v1017 = vstv %s183
    %v1018 = vmul.f32 %v1017, %v281
    %v1019 = vstv %s232
    %v1020 = vmul.f32 %v1019, %v282
    %v1021 = vadd.f32 %v1018, %v1020
    %v1024 = vunpack.c.l.s4 839922192
    %v1025 = vunpack.c.0.s8 %v1024
    %v1026 = vlaneseq
    %v1027 = vshrl.u32 %v1026, 7
    %v1028 = vsub.s32 %v1025, %v1027
    %v1029 = vrot.slane %v1021, %v1028
    %v1031 = vmul.f32 %v926, %v1029
    %v1032 = vmul.f32 %v927, %v1029
    %1035 = vrot.lane.b32.xlu0 %v1031, 125
    %v1036 = vpop.permute.xlu0 %1035
    %1037 = vrot.lane.b32.xlu0 %v1032, 125
    %v1038 = vpop.permute.xlu0 %1037
    %v1039 = vrot.slane %v1036, 4
    %v1040 = vrot.slane %v1038, 4
    %v1041 = vsel %vm47, %v1039, %v1040
    %v1042 = vsel %vm953, %v1036, %v1041
    %v1045 = vadd.f32 %v805, %v1042
    %v1046 = vadd.f32 %v806, %v1038
    %v1047 = vstv %s190
    %v1048 = vmul.f32 %v1047, %v281
    %v1049 = vstv %s239
    %v1050 = vmul.f32 %v1049, %v282
    %v1051 = vadd.f32 %v1048, %v1050
    %v1054 = vunpack.c.l.s4 839922192
    %v1055 = vunpack.c.0.s8 %v1054
    %v1056 = vlaneseq
    %v1057 = vshrl.u32 %v1056, 7
    %v1058 = vsub.s32 %v1055, %v1057
    %v1059 = vrot.slane %v1051, %v1058
    %v1061 = vmul.f32 %v926, %v1059
    %v1062 = vmul.f32 %v927, %v1059
    %1065 = vrot.lane.b32.xlu0 %v1061, 125
    %v1066 = vpop.permute.xlu0 %1065
    %1067 = vrot.lane.b32.xlu0 %v1062, 125
    %v1068 = vpop.permute.xlu0 %1067
    %v1069 = vrot.slane %v1066, 4
    %v1070 = vrot.slane %v1068, 4
    %v1071 = vsel %vm47, %v1069, %v1070
    %v1072 = vsel %vm953, %v1066, %v1071
    %v1075 = vadd.f32 %v835, %v1072
    %v1076 = vadd.f32 %v836, %v1068
    %v1077 = vstv %s197
    %v1078 = vmul.f32 %v1077, %v281
    %v1079 = vstv %s246
    %v1080 = vmul.f32 %v1079, %v282
    %v1081 = vadd.f32 %v1078, %v1080
    %v1084 = vunpack.c.l.s4 839922192
    %v1085 = vunpack.c.0.s8 %v1084
    %v1086 = vlaneseq
    %v1087 = vshrl.u32 %v1086, 7
    %v1088 = vsub.s32 %v1085, %v1087
    %v1089 = vrot.slane %v1081, %v1088
    %v1091 = vmul.f32 %v926, %v1089
    %v1092 = vmul.f32 %v927, %v1089
    %1095 = vrot.lane.b32.xlu0 %v1091, 125
    %v1096 = vpop.permute.xlu0 %1095
    %1097 = vrot.lane.b32.xlu0 %v1092, 125
    %v1098 = vpop.permute.xlu0 %1097
    %v1099 = vrot.slane %v1096, 4
    %v1100 = vrot.slane %v1098, 4
    %v1101 = vsel %vm47, %v1099, %v1100
    %v1102 = vsel %vm953, %v1096, %v1101
    %v1105 = vadd.f32 %v865, %v1102
    %v1106 = vadd.f32 %v866, %v1098
    %v1107 = vstv %s204
    %v1108 = vmul.f32 %v1107, %v281
    %v1109 = vstv %s253
    %v1110 = vmul.f32 %v1109, %v282
    %v1111 = vadd.f32 %v1108, %v1110
    %v1114 = vunpack.c.l.s4 839922192
    %v1115 = vunpack.c.0.s8 %v1114
    %v1116 = vlaneseq
    %v1117 = vshrl.u32 %v1116, 7
    %v1118 = vsub.s32 %v1115, %v1117
    %v1119 = vrot.slane %v1111, %v1118
    %v1121 = vmul.f32 %v926, %v1119
    %v1122 = vmul.f32 %v927, %v1119
    %1125 = vrot.lane.b32.xlu0 %v1121, 125
    %v1126 = vpop.permute.xlu0 %1125
    %1127 = vrot.lane.b32.xlu0 %v1122, 125
    %v1128 = vpop.permute.xlu0 %1127
    %v1129 = vrot.slane %v1126, 4
    %v1130 = vrot.slane %v1128, 4
    %v1131 = vsel %vm47, %v1129, %v1130
    %v1132 = vsel %vm953, %v1126, %v1131
    %v1135 = vadd.f32 %v895, %v1132
    %v1136 = vadd.f32 %v896, %v1128
    %vm1137 = vcmp.ge.f32.partialorder %v274, -1.0
    %vm1138 = vcmp.ge.f32.partialorder %v275, -1.0
    %vm1139 = vcmp.ge.f32.partialorder %v276, -1.0
    %vm1140 = vcmp.le.f32.partialorder %v274, 14.0
    %vm1141 = vcmp.le.f32.partialorder %v275, 14.0
    %vm1142 = vcmp.le.f32.partialorder %v276, 14.0
    %vm1143 = vmand %vm1137, %vm1140
    %vm1144 = vmand %vm1138, %vm1141
    %vm1145 = vmand %vm1139, %vm1142
    %v1146 = vsel %vm1143, 1, 0
    %v1147 = vsel %vm1144, 1, 0
    %v1148 = vsel %vm1145, 1, 0
    %v1149 = vcvt.s32.f32 %v1146
    %v1150 = vcvt.s32.f32 %v1147
    %v1151 = vcvt.s32.f32 %v1148
    %v1155 = vcombine.low %v1149, %v1150
    %1156 = vrot.lane.b32.xlu0 %v1155, 4
    %v1157 = vpop.permute.xlu0 %1156
    %1158 = vrot.lane.b32.xlu0 %v1151, 4
    %v1159 = vpop.permute.xlu0 %1158
    %v1160 = vrot.slane %v1157, 4
    %vm1161 = vcmask 31744
    %v1162 = vsel %vm1161, %v1160, %v1157
    %v1163 = vsel %vm1161, %v1160, %v1159
    %v1166 = vmul.f32 %v298, %v1162
    %v1167 = vmul.f32 %v299, %v1163
    %v1168 = vstv %s163
    %v1169 = vmul.f32 %v1168, %v281
    %v1170 = vstv %s212
    %v1171 = vmul.f32 %v1170, %v282
    %v1172 = vadd.f32 %v1169, %v1171
    %v1175 = vunpack.c.l.s4 839922192
    %v1176 = vunpack.c.0.s8 %v1175
    %v1177 = vlaneseq
    %v1178 = vshrl.u32 %v1177, 7
    %v1179 = vsub.s32 %v1176, %v1178
    %v1180 = vrot.slane %v1172, %v1179
    %v1182 = vmul.f32 %v1166, %v1180
    %v1183 = vmul.f32 %v1167, %v1180
    %1186 = vrot.lane.b32.xlu0 %v1182, 124
    %v1187 = vpop.permute.xlu0 %1186
    %1188 = vrot.lane.b32.xlu0 %v1183, 124
    %v1189 = vpop.permute.xlu0 %1188
    %v1190 = vrot.slane %v1187, 4
    %v1191 = vrot.slane %v1189, 4
    %v1192 = vsel %vm47, %v1190, %v1191
    %vm1193 = vcmask 1014784
    %v1194 = vsel %vm1193, %v1187, %v1192
    %v1196 = vadd.f32 %v956, %v1194
    %v1197 = vstv %s170
    %v1198 = vmul.f32 %v1197, %v281
    %v1199 = vstv %s219
    %v1200 = vmul.f32 %v1199, %v282
    %v1201 = vadd.f32 %v1198, %v1200
    %v1204 = vunpack.c.l.s4 839922192
    %v1205 = vunpack.c.0.s8 %v1204
    %v1206 = vlaneseq
    %v1207 = vshrl.u32 %v1206, 7
    %v1208 = vsub.s32 %v1205, %v1207
    %v1209 = vrot.slane %v1201, %v1208
    %v1211 = vmul.f32 %v1166, %v1209
    %v1212 = vmul.f32 %v1167, %v1209
    %1215 = vrot.lane.b32.xlu0 %v1211, 124
    %v1216 = vpop.permute.xlu0 %1215
    %1217 = vrot.lane.b32.xlu0 %v1212, 124
    %v1218 = vpop.permute.xlu0 %1217
    %v1219 = vrot.slane %v1216, 4
    %v1220 = vrot.slane %v1218, 4
    %v1221 = vsel %vm47, %v1219, %v1220
    %v1222 = vsel %vm1193, %v1216, %v1221
    %v1225 = vadd.f32 %v985, %v1222
    %v1226 = vadd.f32 %v986, %v1218
    %v1227 = vstv %s177
    %v1228 = vmul.f32 %v1227, %v281
    %v1229 = vstv %s226
    %v1230 = vmul.f32 %v1229, %v282
    %v1231 = vadd.f32 %v1228, %v1230
    %v1234 = vunpack.c.l.s4 839922192
    %v1235 = vunpack.c.0.s8 %v1234
    %v1236 = vlaneseq
    %v1237 = vshrl.u32 %v1236, 7
    %v1238 = vsub.s32 %v1235, %v1237
    %v1239 = vrot.slane %v1231, %v1238
    %v1241 = vmul.f32 %v1166, %v1239
    %v1242 = vmul.f32 %v1167, %v1239
    %1245 = vrot.lane.b32.xlu0 %v1241, 124
    %v1246 = vpop.permute.xlu0 %1245
    %1247 = vrot.lane.b32.xlu0 %v1242, 124
    %v1248 = vpop.permute.xlu0 %1247
    %v1249 = vrot.slane %v1246, 4
    %v1250 = vrot.slane %v1248, 4
    %v1251 = vsel %vm47, %v1249, %v1250
    %v1252 = vsel %vm1193, %v1246, %v1251
    %v1255 = vadd.f32 %v1015, %v1252
    %v1256 = vadd.f32 %v1016, %v1248
    %v1257 = vstv %s184
    %v1258 = vmul.f32 %v1257, %v281
    %v1259 = vstv %s233
    %v1260 = vmul.f32 %v1259, %v282
    %v1261 = vadd.f32 %v1258, %v1260
    %v1264 = vunpack.c.l.s4 839922192
    %v1265 = vunpack.c.0.s8 %v1264
    %v1266 = vlaneseq
    %v1267 = vshrl.u32 %v1266, 7
    %v1268 = vsub.s32 %v1265, %v1267
    %v1269 = vrot.slane %v1261, %v1268
    %v1271 = vmul.f32 %v1166, %v1269
    %v1272 = vmul.f32 %v1167, %v1269
    %1275 = vrot.lane.b32.xlu0 %v1271, 124
    %v1276 = vpop.permute.xlu0 %1275
    %1277 = vrot.lane.b32.xlu0 %v1272, 124
    %v1278 = vpop.permute.xlu0 %1277
    %v1279 = vrot.slane %v1276, 4
    %v1280 = vrot.slane %v1278, 4
    %v1281 = vsel %vm47, %v1279, %v1280
    %v1282 = vsel %vm1193, %v1276, %v1281
    %v1285 = vadd.f32 %v1045, %v1282
    %v1286 = vadd.f32 %v1046, %v1278
    %v1287 = vstv %s191
    %v1288 = vmul.f32 %v1287, %v281
    %v1289 = vstv %s240
    %v1290 = vmul.f32 %v1289, %v282
    %v1291 = vadd.f32 %v1288, %v1290
    %v1294 = vunpack.c.l.s4 839922192
    %v1295 = vunpack.c.0.s8 %v1294
    %v1296 = vlaneseq
    %v1297 = vshrl.u32 %v1296, 7
    %v1298 = vsub.s32 %v1295, %v1297
    %v1299 = vrot.slane %v1291, %v1298
    %v1301 = vmul.f32 %v1166, %v1299
    %v1302 = vmul.f32 %v1167, %v1299
    %1305 = vrot.lane.b32.xlu0 %v1301, 124
    %v1306 = vpop.permute.xlu0 %1305
    %1307 = vrot.lane.b32.xlu0 %v1302, 124
    %v1308 = vpop.permute.xlu0 %1307
    %v1309 = vrot.slane %v1306, 4
    %v1310 = vrot.slane %v1308, 4
    %v1311 = vsel %vm47, %v1309, %v1310
    %v1312 = vsel %vm1193, %v1306, %v1311
    %v1315 = vadd.f32 %v1075, %v1312
    %v1316 = vadd.f32 %v1076, %v1308
    %v1317 = vstv %s198
    %v1318 = vmul.f32 %v1317, %v281
    %v1319 = vstv %s247
    %v1320 = vmul.f32 %v1319, %v282
    %v1321 = vadd.f32 %v1318, %v1320
    %v1324 = vunpack.c.l.s4 839922192
    %v1325 = vunpack.c.0.s8 %v1324
    %v1326 = vlaneseq
    %v1327 = vshrl.u32 %v1326, 7
    %v1328 = vsub.s32 %v1325, %v1327
    %v1329 = vrot.slane %v1321, %v1328
    %v1331 = vmul.f32 %v1166, %v1329
    %v1332 = vmul.f32 %v1167, %v1329
    %1335 = vrot.lane.b32.xlu0 %v1331, 124
    %v1336 = vpop.permute.xlu0 %1335
    %1337 = vrot.lane.b32.xlu0 %v1332, 124
    %v1338 = vpop.permute.xlu0 %1337
    %v1339 = vrot.slane %v1336, 4
    %v1340 = vrot.slane %v1338, 4
    %v1341 = vsel %vm47, %v1339, %v1340
    %v1342 = vsel %vm1193, %v1336, %v1341
    %v1345 = vadd.f32 %v1105, %v1342
    %v1346 = vadd.f32 %v1106, %v1338
    %v1347 = vstv %s205
    %v1348 = vmul.f32 %v1347, %v281
    %v1349 = vstv %s254
    %v1350 = vmul.f32 %v1349, %v282
    %v1351 = vadd.f32 %v1348, %v1350
    %v1354 = vunpack.c.l.s4 839922192
    %v1355 = vunpack.c.0.s8 %v1354
    %v1356 = vlaneseq
    %v1357 = vshrl.u32 %v1356, 7
    %v1358 = vsub.s32 %v1355, %v1357
    %v1359 = vrot.slane %v1351, %v1358
    %v1361 = vmul.f32 %v1166, %v1359
    %v1362 = vmul.f32 %v1167, %v1359
    %1365 = vrot.lane.b32.xlu0 %v1361, 124
    %v1366 = vpop.permute.xlu0 %1365
    %1367 = vrot.lane.b32.xlu0 %v1362, 124
    %v1368 = vpop.permute.xlu0 %1367
    %v1369 = vrot.slane %v1366, 4
    %v1370 = vrot.slane %v1368, 4
    %v1371 = vsel %vm47, %v1369, %v1370
    %v1372 = vsel %vm1193, %v1366, %v1371
    %v1375 = vadd.f32 %v1135, %v1372
    %v1376 = vadd.f32 %v1136, %v1368
    %vm1377 = vcmp.ge.f32.partialorder %v274, -2.0
    %vm1378 = vcmp.ge.f32.partialorder %v275, -2.0
    %vm1379 = vcmp.ge.f32.partialorder %v276, -2.0
    %vm1380 = vcmp.le.f32.partialorder %v274, 13.0
    %vm1381 = vcmp.le.f32.partialorder %v275, 13.0
    %vm1382 = vcmp.le.f32.partialorder %v276, 13.0
    %vm1383 = vmand %vm1377, %vm1380
    %vm1384 = vmand %vm1378, %vm1381
    %vm1385 = vmand %vm1379, %vm1382
    %v1386 = vsel %vm1383, 1, 0
    %v1387 = vsel %vm1384, 1, 0
    %v1388 = vsel %vm1385, 1, 0
    %v1389 = vcvt.s32.f32 %v1386
    %v1390 = vcvt.s32.f32 %v1387
    %v1391 = vcvt.s32.f32 %v1388
    %v1395 = vcombine.low %v1389, %v1390
    %1396 = vrot.lane.b32.xlu0 %v1395, 5
    %v1397 = vpop.permute.xlu0 %1396
    %1398 = vrot.lane.b32.xlu0 %v1391, 5
    %v1399 = vpop.permute.xlu0 %1398
    %v1400 = vrot.slane %v1397, 4
    %vm1401 = vcmask 39936
    %v1402 = vsel %vm1401, %v1400, %v1397
    %v1403 = vsel %vm1401, %v1400, %v1399
    %v1406 = vmul.f32 %v298, %v1402
    %v1407 = vmul.f32 %v299, %v1403
    %v1408 = vstv %s164
    %v1409 = vmul.f32 %v1408, %v281
    %v1410 = vstv %s213
    %v1411 = vmul.f32 %v1410, %v282
    %v1412 = vadd.f32 %v1409, %v1411
    %v1415 = vunpack.c.l.s4 839922192
    %v1416 = vunpack.c.0.s8 %v1415
    %v1417 = vlaneseq
    %v1418 = vshrl.u32 %v1417, 7
    %v1419 = vsub.s32 %v1416, %v1418
    %v1420 = vrot.slane %v1412, %v1419
    %v1422 = vmul.f32 %v1406, %v1420
    %v1423 = vmul.f32 %v1407, %v1420
    %1426 = vrot.lane.b32.xlu0 %v1422, 123
    %v1427 = vpop.permute.xlu0 %1426
    %1428 = vrot.lane.b32.xlu0 %v1423, 123
    %v1429 = vpop.permute.xlu0 %1428
    %v1430 = vrot.slane %v1427, 4
    %v1431 = vrot.slane %v1429, 4
    %v1432 = vsel %vm47, %v1430, %v1431
    %vm1433 = vcmask 1006592
    %v1434 = vsel %vm1433, %v1427, %v1432
    %v1436 = vadd.f32 %v1196, %v1434
    %v1437 = vstv %s171
    %v1438 = vmul.f32 %v1437, %v281
    %v1439 = vstv %s220
    %v1440 = vmul.f32 %v1439, %v282
    %v1441 = vadd.f32 %v1438, %v1440
    %v1444 = vunpack.c.l.s4 839922192
    %v1445 = vunpack.c.0.s8 %v1444
    %v1446 = vlaneseq
    %v1447 = vshrl.u32 %v1446, 7
    %v1448 = vsub.s32 %v1445, %v1447
    %v1449 = vrot.slane %v1441, %v1448
    %v1451 = vmul.f32 %v1406, %v1449
    %v1452 = vmul.f32 %v1407, %v1449
    %1455 = vrot.lane.b32.xlu0 %v1451, 123
    %v1456 = vpop.permute.xlu0 %1455
    %1457 = vrot.lane.b32.xlu0 %v1452, 123
    %v1458 = vpop.permute.xlu0 %1457
    %v1459 = vrot.slane %v1456, 4
    %v1460 = vrot.slane %v1458, 4
    %v1461 = vsel %vm47, %v1459, %v1460
    %v1462 = vsel %vm1433, %v1456, %v1461
    %v1465 = vadd.f32 %v1225, %v1462
    %v1466 = vadd.f32 %v1226, %v1458
    %v1467 = vstv %s178
    %v1468 = vmul.f32 %v1467, %v281
    %v1469 = vstv %s227
    %v1470 = vmul.f32 %v1469, %v282
    %v1471 = vadd.f32 %v1468, %v1470
    %v1474 = vunpack.c.l.s4 839922192
    %v1475 = vunpack.c.0.s8 %v1474
    %v1476 = vlaneseq
    %v1477 = vshrl.u32 %v1476, 7
    %v1478 = vsub.s32 %v1475, %v1477
    %v1479 = vrot.slane %v1471, %v1478
    %v1481 = vmul.f32 %v1406, %v1479
    %v1482 = vmul.f32 %v1407, %v1479
    %1485 = vrot.lane.b32.xlu0 %v1481, 123
    %v1486 = vpop.permute.xlu0 %1485
    %1487 = vrot.lane.b32.xlu0 %v1482, 123
    %v1488 = vpop.permute.xlu0 %1487
    %v1489 = vrot.slane %v1486, 4
    %v1490 = vrot.slane %v1488, 4
    %v1491 = vsel %vm47, %v1489, %v1490
    %v1492 = vsel %vm1433, %v1486, %v1491
    %v1495 = vadd.f32 %v1255, %v1492
    %v1496 = vadd.f32 %v1256, %v1488
    %v1497 = vstv %s185
    %v1498 = vmul.f32 %v1497, %v281
    %v1499 = vstv %s234
    %v1500 = vmul.f32 %v1499, %v282
    %v1501 = vadd.f32 %v1498, %v1500
    %v1504 = vunpack.c.l.s4 839922192
    %v1505 = vunpack.c.0.s8 %v1504
    %v1506 = vlaneseq
    %v1507 = vshrl.u32 %v1506, 7
    %v1508 = vsub.s32 %v1505, %v1507
    %v1509 = vrot.slane %v1501, %v1508
    %v1511 = vmul.f32 %v1406, %v1509
    %v1512 = vmul.f32 %v1407, %v1509
    %1515 = vrot.lane.b32.xlu0 %v1511, 123
    %v1516 = vpop.permute.xlu0 %1515
    %1517 = vrot.lane.b32.xlu0 %v1512, 123
    %v1518 = vpop.permute.xlu0 %1517
    %v1519 = vrot.slane %v1516, 4
    %v1520 = vrot.slane %v1518, 4
    %v1521 = vsel %vm47, %v1519, %v1520
    %v1522 = vsel %vm1433, %v1516, %v1521
    %v1525 = vadd.f32 %v1285, %v1522
    %v1526 = vadd.f32 %v1286, %v1518
    %v1527 = vstv %s192
    %v1528 = vmul.f32 %v1527, %v281
    %v1529 = vstv %s241
    %v1530 = vmul.f32 %v1529, %v282
    %v1531 = vadd.f32 %v1528, %v1530
    %v1534 = vunpack.c.l.s4 839922192
    %v1535 = vunpack.c.0.s8 %v1534
    %v1536 = vlaneseq
    %v1537 = vshrl.u32 %v1536, 7
    %v1538 = vsub.s32 %v1535, %v1537
    %v1539 = vrot.slane %v1531, %v1538
    %v1541 = vmul.f32 %v1406, %v1539
    %v1542 = vmul.f32 %v1407, %v1539
    %1545 = vrot.lane.b32.xlu0 %v1541, 123
    %v1546 = vpop.permute.xlu0 %1545
    %1547 = vrot.lane.b32.xlu0 %v1542, 123
    %v1548 = vpop.permute.xlu0 %1547
    %v1549 = vrot.slane %v1546, 4
    %v1550 = vrot.slane %v1548, 4
    %v1551 = vsel %vm47, %v1549, %v1550
    %v1552 = vsel %vm1433, %v1546, %v1551
    %v1555 = vadd.f32 %v1315, %v1552
    %v1556 = vadd.f32 %v1316, %v1548
    %v1557 = vstv %s199
    %v1558 = vmul.f32 %v1557, %v281
    %v1559 = vstv %s248
    %v1560 = vmul.f32 %v1559, %v282
    %v1561 = vadd.f32 %v1558, %v1560
    %v1564 = vunpack.c.l.s4 839922192
    %v1565 = vunpack.c.0.s8 %v1564
    %v1566 = vlaneseq
    %v1567 = vshrl.u32 %v1566, 7
    %v1568 = vsub.s32 %v1565, %v1567
    %v1569 = vrot.slane %v1561, %v1568
    %v1571 = vmul.f32 %v1406, %v1569
    %v1572 = vmul.f32 %v1407, %v1569
    %1575 = vrot.lane.b32.xlu0 %v1571, 123
    %v1576 = vpop.permute.xlu0 %1575
    %1577 = vrot.lane.b32.xlu0 %v1572, 123
    %v1578 = vpop.permute.xlu0 %1577
    %v1579 = vrot.slane %v1576, 4
    %v1580 = vrot.slane %v1578, 4
    %v1581 = vsel %vm47, %v1579, %v1580
    %v1582 = vsel %vm1433, %v1576, %v1581
    %v1585 = vadd.f32 %v1345, %v1582
    %v1586 = vadd.f32 %v1346, %v1578
    %v1587 = vstv %s206
    %v1588 = vmul.f32 %v1587, %v281
    %v1589 = vstv %s255
    %v1590 = vmul.f32 %v1589, %v282
    %v1591 = vadd.f32 %v1588, %v1590
    %v1594 = vunpack.c.l.s4 839922192
    %v1595 = vunpack.c.0.s8 %v1594
    %v1596 = vlaneseq
    %v1597 = vshrl.u32 %v1596, 7
    %v1598 = vsub.s32 %v1595, %v1597
    %v1599 = vrot.slane %v1591, %v1598
    %v1601 = vmul.f32 %v1406, %v1599
    %v1602 = vmul.f32 %v1407, %v1599
    %1605 = vrot.lane.b32.xlu0 %v1601, 123
    %v1606 = vpop.permute.xlu0 %1605
    %1607 = vrot.lane.b32.xlu0 %v1602, 123
    %v1608 = vpop.permute.xlu0 %1607
    %v1609 = vrot.slane %v1606, 4
    %v1610 = vrot.slane %v1608, 4
    %v1611 = vsel %vm47, %v1609, %v1610
    %v1612 = vsel %vm1433, %v1606, %v1611
    %v1615 = vadd.f32 %v1375, %v1612
    %v1616 = vadd.f32 %v1376, %v1608
    %vm1617 = vcmp.ge.f32.partialorder %v274, -3.0
    %vm1618 = vcmp.ge.f32.partialorder %v275, -3.0
    %vm1619 = vcmp.ge.f32.partialorder %v276, -3.0
    %vm1620 = vcmp.le.f32.partialorder %v274, 12.0
    %vm1621 = vcmp.le.f32.partialorder %v275, 12.0
    %vm1622 = vcmp.le.f32.partialorder %v276, 12.0
    %vm1623 = vmand %vm1617, %vm1620
    %vm1624 = vmand %vm1618, %vm1621
    %vm1625 = vmand %vm1619, %vm1622
    %v1626 = vsel %vm1623, 1, 0
    %v1627 = vsel %vm1624, 1, 0
    %v1628 = vsel %vm1625, 1, 0
    %v1629 = vcvt.s32.f32 %v1626
    %v1630 = vcvt.s32.f32 %v1627
    %v1631 = vcvt.s32.f32 %v1628
    %v1635 = vcombine.low %v1629, %v1630
    %1636 = vrot.lane.b32.xlu0 %v1635, 6
    %v1637 = vpop.permute.xlu0 %1636
    %1638 = vrot.lane.b32.xlu0 %v1631, 6
    %v1639 = vpop.permute.xlu0 %1638
    %v1640 = vrot.slane %v1637, 4
    %vm1641 = vcmask 48128
    %v1642 = vsel %vm1641, %v1640, %v1637
    %v1643 = vsel %vm1641, %v1640, %v1639
    %v1646 = vmul.f32 %v298, %v1642
    %v1647 = vmul.f32 %v299, %v1643
    %v1648 = vstv %s165
    %v1649 = vmul.f32 %v1648, %v281
    %v1650 = vstv %s214
    %v1651 = vmul.f32 %v1650, %v282
    %v1652 = vadd.f32 %v1649, %v1651
    %v1655 = vunpack.c.l.s4 839922192
    %v1656 = vunpack.c.0.s8 %v1655
    %v1657 = vlaneseq
    %v1658 = vshrl.u32 %v1657, 7
    %v1659 = vsub.s32 %v1656, %v1658
    %v1660 = vrot.slane %v1652, %v1659
    %v1662 = vmul.f32 %v1646, %v1660
    %v1663 = vmul.f32 %v1647, %v1660
    %1666 = vrot.lane.b32.xlu0 %v1662, 122
    %v1667 = vpop.permute.xlu0 %1666
    %1668 = vrot.lane.b32.xlu0 %v1663, 122
    %v1669 = vpop.permute.xlu0 %1668
    %v1670 = vrot.slane %v1667, 4
    %v1671 = vrot.slane %v1669, 4
    %v1672 = vsel %vm47, %v1670, %v1671
    %vm1673 = vcmask 998400
    %v1674 = vsel %vm1673, %v1667, %v1672
    %v1676 = vadd.f32 %v1436, %v1674
    %v1677 = vstv %s172
    %v1678 = vmul.f32 %v1677, %v281
    %v1679 = vstv %s221
    %v1680 = vmul.f32 %v1679, %v282
    %v1681 = vadd.f32 %v1678, %v1680
    %v1684 = vunpack.c.l.s4 839922192
    %v1685 = vunpack.c.0.s8 %v1684
    %v1686 = vlaneseq
    %v1687 = vshrl.u32 %v1686, 7
    %v1688 = vsub.s32 %v1685, %v1687
    %v1689 = vrot.slane %v1681, %v1688
    %v1691 = vmul.f32 %v1646, %v1689
    %v1692 = vmul.f32 %v1647, %v1689
    %1695 = vrot.lane.b32.xlu0 %v1691, 122
    %v1696 = vpop.permute.xlu0 %1695
    %1697 = vrot.lane.b32.xlu0 %v1692, 122
    %v1698 = vpop.permute.xlu0 %1697
    %v1699 = vrot.slane %v1696, 4
    %v1700 = vrot.slane %v1698, 4
    %v1701 = vsel %vm47, %v1699, %v1700
    %v1702 = vsel %vm1673, %v1696, %v1701
    %v1705 = vadd.f32 %v1465, %v1702
    %v1706 = vadd.f32 %v1466, %v1698
    %v1707 = vstv %s179
    %v1708 = vmul.f32 %v1707, %v281
    %v1709 = vstv %s228
    %v1710 = vmul.f32 %v1709, %v282
    %v1711 = vadd.f32 %v1708, %v1710
    %v1714 = vunpack.c.l.s4 839922192
    %v1715 = vunpack.c.0.s8 %v1714
    %v1716 = vlaneseq
    %v1717 = vshrl.u32 %v1716, 7
    %v1718 = vsub.s32 %v1715, %v1717
    %v1719 = vrot.slane %v1711, %v1718
    %v1721 = vmul.f32 %v1646, %v1719
    %v1722 = vmul.f32 %v1647, %v1719
    %1725 = vrot.lane.b32.xlu0 %v1721, 122
    %v1726 = vpop.permute.xlu0 %1725
    %1727 = vrot.lane.b32.xlu0 %v1722, 122
    %v1728 = vpop.permute.xlu0 %1727
    %v1729 = vrot.slane %v1726, 4
    %v1730 = vrot.slane %v1728, 4
    %v1731 = vsel %vm47, %v1729, %v1730
    %v1732 = vsel %vm1673, %v1726, %v1731
    %v1735 = vadd.f32 %v1495, %v1732
    %v1736 = vadd.f32 %v1496, %v1728
    %v1737 = vstv %s186
    %v1738 = vmul.f32 %v1737, %v281
    %v1739 = vstv %s235
    %v1740 = vmul.f32 %v1739, %v282
    %v1741 = vadd.f32 %v1738, %v1740
    %v1744 = vunpack.c.l.s4 839922192
    %v1745 = vunpack.c.0.s8 %v1744
    %v1746 = vlaneseq
    %v1747 = vshrl.u32 %v1746, 7
    %v1748 = vsub.s32 %v1745, %v1747
    %v1749 = vrot.slane %v1741, %v1748
    %v1751 = vmul.f32 %v1646, %v1749
    %v1752 = vmul.f32 %v1647, %v1749
    %1755 = vrot.lane.b32.xlu0 %v1751, 122
    %v1756 = vpop.permute.xlu0 %1755
    %1757 = vrot.lane.b32.xlu0 %v1752, 122
    %v1758 = vpop.permute.xlu0 %1757
    %v1759 = vrot.slane %v1756, 4
    %v1760 = vrot.slane %v1758, 4
    %v1761 = vsel %vm47, %v1759, %v1760
    %v1762 = vsel %vm1673, %v1756, %v1761
    %v1765 = vadd.f32 %v1525, %v1762
    %v1766 = vadd.f32 %v1526, %v1758
    %v1767 = vstv %s193
    %v1768 = vmul.f32 %v1767, %v281
    %v1769 = vstv %s242
    %v1770 = vmul.f32 %v1769, %v282
    %v1771 = vadd.f32 %v1768, %v1770
    %v1774 = vunpack.c.l.s4 839922192
    %v1775 = vunpack.c.0.s8 %v1774
    %v1776 = vlaneseq
    %v1777 = vshrl.u32 %v1776, 7
    %v1778 = vsub.s32 %v1775, %v1777
    %v1779 = vrot.slane %v1771, %v1778
    %v1781 = vmul.f32 %v1646, %v1779
    %v1782 = vmul.f32 %v1647, %v1779
    %1785 = vrot.lane.b32.xlu0 %v1781, 122
    %v1786 = vpop.permute.xlu0 %1785
    %1787 = vrot.lane.b32.xlu0 %v1782, 122
    %v1788 = vpop.permute.xlu0 %1787
    %v1789 = vrot.slane %v1786, 4
    %v1790 = vrot.slane %v1788, 4
    %v1791 = vsel %vm47, %v1789, %v1790
    %v1792 = vsel %vm1673, %v1786, %v1791
    %v1795 = vadd.f32 %v1555, %v1792
    %v1796 = vadd.f32 %v1556, %v1788
    %v1797 = vstv %s200
    %v1798 = vmul.f32 %v1797, %v281
    %v1799 = vstv %s249
    %v1800 = vmul.f32 %v1799, %v282
    %v1801 = vadd.f32 %v1798, %v1800
    %v1804 = vunpack.c.l.s4 839922192
    %v1805 = vunpack.c.0.s8 %v1804
    %v1806 = vlaneseq
    %v1807 = vshrl.u32 %v1806, 7
    %v1808 = vsub.s32 %v1805, %v1807
    %v1809 = vrot.slane %v1801, %v1808
    %v1811 = vmul.f32 %v1646, %v1809
    %v1812 = vmul.f32 %v1647, %v1809
    %1815 = vrot.lane.b32.xlu0 %v1811, 122
    %v1816 = vpop.permute.xlu0 %1815
    %1817 = vrot.lane.b32.xlu0 %v1812, 122
    %v1818 = vpop.permute.xlu0 %1817
    %v1819 = vrot.slane %v1816, 4
    %v1820 = vrot.slane %v1818, 4
    %v1821 = vsel %vm47, %v1819, %v1820
    %v1822 = vsel %vm1673, %v1816, %v1821
    %v1825 = vadd.f32 %v1585, %v1822
    %v1826 = vadd.f32 %v1586, %v1818
    %v1827 = vstv %s207
    %v1828 = vmul.f32 %v1827, %v281
    %v1829 = vstv %s256
    %v1830 = vmul.f32 %v1829, %v282
    %v1831 = vadd.f32 %v1828, %v1830
    %v1834 = vunpack.c.l.s4 839922192
    %v1835 = vunpack.c.0.s8 %v1834
    %v1836 = vlaneseq
    %v1837 = vshrl.u32 %v1836, 7
    %v1838 = vsub.s32 %v1835, %v1837
    %v1839 = vrot.slane %v1831, %v1838
    %v1841 = vmul.f32 %v1646, %v1839
    %v1842 = vmul.f32 %v1647, %v1839
    %1845 = vrot.lane.b32.xlu0 %v1841, 122
    %v1846 = vpop.permute.xlu0 %1845
    %1847 = vrot.lane.b32.xlu0 %v1842, 122
    %v1848 = vpop.permute.xlu0 %1847
    %v1849 = vrot.slane %v1846, 4
    %v1850 = vrot.slane %v1848, 4
    %v1851 = vsel %vm47, %v1849, %v1850
    %v1852 = vsel %vm1673, %v1846, %v1851
    %v1855 = vadd.f32 %v1615, %v1852
    %v1856 = vadd.f32 %v1616, %v1848
    %1859 = vrot.lane.b32.xlu0 %v1705, 112
    %v1860 = vpop.permute.xlu0 %1859
    %1861 = vrot.lane.b32.xlu0 %v1706, 112
    %v1862 = vpop.permute.xlu0 %1861
    %v1863 = vrot.slane %v1860, 4
    %v1864 = vrot.slane %v1862, 4
    %v1865 = vsel %vm47, %v1863, %v1864
    %vm1866 = vcmask 916480
    %v1867 = vsel %vm1866, %v1860, %v1865
    %v1869 = vadd.f32 %v1676, %v1867
    %1872 = vrot.lane.b32.xlu0 %v1765, 112
    %v1873 = vpop.permute.xlu0 %1872
    %1874 = vrot.lane.b32.xlu0 %v1766, 112
    %v1875 = vpop.permute.xlu0 %1874
    %v1876 = vrot.slane %v1873, 4
    %v1877 = vrot.slane %v1875, 4
    %v1878 = vsel %vm47, %v1876, %v1877
    %v1879 = vsel %vm1866, %v1873, %v1878
    %v1882 = vadd.f32 %v1735, %v1879
    %v1883 = vadd.f32 %v1736, %v1875
    %1886 = vrot.lane.b32.xlu0 %v1825, 112
    %v1887 = vpop.permute.xlu0 %1886
    %1888 = vrot.lane.b32.xlu0 %v1826, 112
    %v1889 = vpop.permute.xlu0 %1888
    %v1890 = vrot.slane %v1887, 4
    %v1891 = vrot.slane %v1889, 4
    %v1892 = vsel %vm47, %v1890, %v1891
    %v1893 = vsel %vm1866, %v1887, %v1892
    %v1896 = vadd.f32 %v1795, %v1893
    %v1897 = vadd.f32 %v1796, %v1889
    %1900 = vrot.lane.b32.xlu0 %v1882, 96
    %v1901 = vpop.permute.xlu0 %1900
    %1902 = vrot.lane.b32.xlu0 %v1883, 96
    %v1903 = vpop.permute.xlu0 %1902
    %v1904 = vrot.slane %v1901, 4
    %v1905 = vrot.slane %v1903, 4
    %v1906 = vsel %vm47, %v1904, %v1905
    %vm1907 = vcmask 785408
    %v1908 = vsel %vm1907, %v1901, %v1906
    %v1910 = vadd.f32 %v1869, %v1908
    %1913 = vrot.lane.b32.xlu0 %v1855, 96
    %v1914 = vpop.permute.xlu0 %1913
    %1915 = vrot.lane.b32.xlu0 %v1856, 96
    %v1916 = vpop.permute.xlu0 %1915
    %v1917 = vrot.slane %v1914, 4
    %v1918 = vrot.slane %v1916, 4
    %v1919 = vsel %vm47, %v1917, %v1918
    %v1920 = vsel %vm1907, %v1914, %v1919
    %v1923 = vadd.f32 %v1896, %v1920
    %v1924 = vadd.f32 %v1897, %v1916
    %1927 = vrot.lane.b32.xlu0 %v1923, 64
    %v1928 = vpop.permute.xlu0 %1927
    %1929 = vrot.lane.b32.xlu0 %v1924, 64
    %v1930 = vpop.permute.xlu0 %1929
    %v1931 = vrot.slane %v1928, 4
    %v1932 = vrot.slane %v1930, 4
    %v1933 = vsel %vm47, %v1931, %v1932
    %vm1934 = vcmask 523264
    %v1935 = vsel %vm1934, %v1928, %v1933
    %v1937 = vadd.f32 %v1910, %v1935
    %v1939 = vrot.slane %v1937, 6
    %v1940 = vrot.slane %v1939, 4
    %v1942 = vadd.f32 %v1937, %v1940
    %v1943 = vxor.u32 %v1942, 2147483648
    %v1944 = vmul.f32 %v1943, 1.442695
    %v1945 = vpow.pop %v1944
    %v1946 = vadd.f32 %v1945, 1.0
    %v1947 = vrcp.pop %v1946
    %v1948 = vmul.f32 1.0, %v1947
    %v1949 = vld [vmem:[#allocation3] sm:$0xff]
    %v1950 = vld [vmem:[#allocation3 + $0x8] sm:$0xff]
    %v1953 = vunpack.c.l.s4 1966171168
    %v1954 = vunpack.c.0.s8 %v1953
    %v1955 = vlaneseq
    %v1956 = vshrl.u32 %v1955, 7
    %v1957 = vsub.s32 %v1954, %v1956
    %v1958 = vrot.slane %v1948, %v1957
    %v1959 = vcombine.high %v1958, %v1958
    %v1961 = vunpack.c.l.s4 1966171168
    %v1962 = vunpack.c.0.s8 %v1961
    %v1963 = vlaneseq
    %v1964 = vshrl.u32 %v1963, 7
    %v1965 = vsub.s32 %v1962, %v1964
    %v1966 = vrot.slane %v1958, %v1965
    %v1968 = vunpack.c.l.s4 1966171168
    %v1969 = vunpack.c.0.s8 %v1968
    %v1970 = vlaneseq
    %v1971 = vshrl.u32 %v1970, 7
    %v1972 = vsub.s32 %v1969, %v1971
    %v1973 = vrot.slane %v1959, %v1972
    %v1974 = vlaneseq
    %v1975 = vshrl.u32 %v1974, 7
    %v1976 = vsub.s32 0, %v1975
    %v1977 = vrot.slane %v1966, %v1976
    %v1978 = vlaneseq
    %v1979 = vshrl.u32 %v1978, 7
    %v1980 = vsub.s32 1, %v1979
    %v1981 = vrot.slane %v1966, %v1980
    %v1982 = vlaneseq
    %v1983 = vshrl.u32 %v1982, 7
    %v1984 = vsub.s32 0, %v1983
    %v1985 = vrot.slane %v1973, %v1984
    %v1986 = vlaneseq
    %v1987 = vshrl.u32 %v1986, 7
    %v1988 = vsub.s32 1, %v1987
    %v1989 = vrot.slane %v1973, %v1988
    %v1990 = vcombine.low %v1977, %v1981
    %v1991 = vcombine.low %v1985, %v1989
    %v1994 = vmul.f32 %v1949, %v1990
    %v1995 = vmul.f32 %v1950, %v1991
    %1996 = vst [vmem:[#allocation8] sm:$0xff] %v1994
    %1997 = vst [vmem:[#allocation8 + $0x8] sm:$0xff] %v1995
    // Predicated region
    $region18: #{tpu_custom_call.1} parent=1 // pred_check
      _
    $region19: #{tpu_custom_call.1} parent=1 // pred_check_branch
      %1999 = sbr.rel (0) target = $region21
    $region20: #{tpu_custom_call.1} parent=1 // pred_region
      %s2001 = ssub.s32 256, 256
      %2002 = vsyncadd [#allocation5], %s2001
      %s2003 = sshll.u32 [#allocation8], 4
      %s2004 = int_to_ptr.vmem [resolvable:$true] %s2003
      %2009 = dma.vmem_to_hbm [thread:$0]  %s2004, 256, %s2, [#allocation5], 128, 128, 8
    $region21: #{tpu_custom_call.1} parent=1 // pred_fallthru
      _
    // Predicated region
    $region22: #{tpu_custom_call.1} parent=1 // pred_check
      _
    $region23: #{tpu_custom_call.1} parent=1 // pred_check_branch
      %2011 = sbr.rel (0) target = $region25
    $region24: #{tpu_custom_call.1} parent=1 // pred_region
      %2012 = dma.done [#allocation5], 256
    $region25: #{tpu_custom_call.1} parent=1 // pred_fallthru
      _
    %2013 = vsyncpa [#allocation4], 1
    %2014 = vsyncpa [#allocation5], 1
    %2015 = vsyncpa [#allocation6], 1

</llo_original>
